<compile_context>
chip_gen: v6e
topology: v6e:2x2x1
jax: 0.10.0
libtpu: 0.0.40
codegen_flags: <defaults>
</compile_context>

<pallas_src>
import numpy as np
import jax
import jax.numpy as jnp
from jax import lax
from jax.experimental import pallas as pl
from jax.experimental.pallas import tpu as pltpu


# --------------------------------- fused kernel ---------------------------------- #
def fused_model_kernel(tok_ref, comb_ref, w_rec_ref, w_head_ref, b_head_ref,
                       xa_ref, offx_ref, offw_ref, out_ref):
    # tok_ref:    (S*B_pad, 1) int32, time-major flattened tokens (row = t*B_pad + b), pad rows = 0
    # comb_ref:   (V+1, 4*GP)  pre-folded emb @ w_in (gate-major, lane-padded); last row = gate bias
    # w_rec_ref:  (GP, 4*GP)   block-diagonal fused recurrent weights for the 3 LSTMs
    # w_head_ref: (GP, NH)     fused head weights (s-anchor | t-anchor | offset logits)
    # b_head_ref: (1, NH)
    # xa_ref:     (B_pad, 2, anc) anchor points, lane-dense (reduce over last axis), pad rows = 0
    # offx_ref:   (B_pad, 1)
    # offw_ref:   (9, 2)       fixed OffsetNet table
    # out_ref:    (B_pad, 4)
    SBp = tok_ref.shape[0]
    Vaug = comb_ref.shape[0]            # vocab + 1 (last row = fused gate bias)
    B_pad = xa_ref.shape[0]
    anc = xa_ref.shape[2]
    n_off = offw_ref.shape[0]
    GP = w_rec_ref.shape[0]             # padded fused hidden width (128)
    S = SBp // B_pad

    # ---- embedding + input projection + bias in ONE matmul ----
    # augmented one-hot: column Vaug-1 is always 1, so the bias row of `combined` is added to
    # every timestep's projection (no per-step bias add in the recurrence).
    tok = tok_ref[...]                                                     # (S*B_pad, 1)
    viota = lax.broadcasted_iota(jnp.int32, (SBp, Vaug), 1)
    onehot = jnp.logical_or(viota == tok, viota == (Vaug - 1)).astype(jnp.float32)
    xproj = jnp.dot(onehot, comb_ref[...],
                    preferred_element_type=jnp.float32)                    # (S*B_pad, 4*GP)

    w_rec = w_rec_ref[...]                                                 # (GP, 4*GP)

    def sigm(z):                        # exactly sigmoid(z); one EUP push per call
        return 0.5 * jnp.tanh(0.5 * z) + 0.5

    # ---- peeled t = 0 step (h = c = 0: no recurrent matmul, no f*c term) ----
    g0 = xproj[0:B_pad, :]
    c = sigm(g0[:, 0 * GP:1 * GP]) * jnp.tanh(g0[:, 2 * GP:3 * GP])
    h = sigm(g0[:, 3 * GP:4 * GP]) * jnp.tanh(c)

    # ---- fused 3-LSTM recurrence, fully unrolled over the short static time axis ----
    for t in range(1, S):
        gates = (xproj[t * B_pad:(t + 1) * B_pad, :]
                 + jnp.dot(h, w_rec, preferred_element_type=jnp.float32))  # (B_pad, 4*GP)
        # gate-major layout -> every slice is a full, vreg-aligned 128-lane group
        i_g = sigm(gates[:, 0 * GP:1 * GP])
        f_g = sigm(gates[:, 1 * GP:2 * GP])
        g_g = jnp.tanh(gates[:, 2 * GP:3 * GP])
        o_g = sigm(gates[:, 3 * GP:4 * GP])
        c = f_g * c + i_g * g_g
        h = o_g * jnp.tanh(c)

    # ---- fused heads: one matmul produces all three logit groups ----
    logits = (jnp.dot(h, w_head_ref[...], preferred_element_type=jnp.float32)
              + b_head_ref[...])                                           # (B_pad, NH)

    def softmax(z):                     # exact reciprocal; off the hot recurrence path
        z = z - jnp.max(z, axis=1, keepdims=True)
        ez = jnp.exp(z)
        return ez / jnp.sum(ez, axis=1, keepdims=True)

    a_s = softmax(logits[:, 0:anc])                      # (B_pad, 25)
    a_t = softmax(logits[:, anc:2 * anc])                # (B_pad, 25)
    a_o = softmax(logits[:, 2 * anc:2 * anc + n_off])    # (B_pad, 9)

    xa = xa_ref[...]                                     # (B_pad, 2, anc)  lane-dense
    s_out = jnp.sum(a_s[:, None, :] * xa, axis=-1)       # (B_pad, 2)
    t_anc = jnp.sum(a_t[:, None, :] * xa, axis=-1)       # (B_pad, 2)
    # off_pts[b,a,:] = offx[b] * offw[a,:]  =>  weighted sum = offx * (a_o @ offw)
    t_off = offx_ref[...] * jnp.dot(a_o, offw_ref[...],
                                    preferred_element_type=jnp.float32)   # (B_pad, 2)

    # two direct slice stores; no concat lane-shuffle
    out_ref[:, 0:2] = s_out
    out_ref[:, 2:4] = t_anc + t_off


# ----------------------------------- wrapper -------------------------------------- #
def _forward(s_tokens, x, kp):
    B, S = s_tokens.shape
    anc = x.shape[1] - 1                                            # 25
    B_pad = 8                                                       # one sublane group
    # tiny layout plumbing (fuses under jit); pad batch to 8 sublanes, pad tokens with 0
    # (padding_idx -> zero embedding row), pad anchors/offsets with zeros.
    tok_pad = jnp.zeros((B_pad, S), jnp.int32).at[:B].set(s_tokens.astype(jnp.int32))
    tok_col = jnp.transpose(tok_pad, (1, 0)).reshape(S * B_pad, 1)  # time-major (S*B_pad, 1)
    xa_t = jnp.zeros((B_pad, 2, anc), jnp.float32).at[:B].set(
        jnp.transpose(x[:, :anc, :], (0, 2, 1)))                    # (B_pad, 2, anc) lane-dense
    offx = jnp.zeros((B_pad, 1), jnp.float32).at[:B].set(x[:, anc, 0:1])

    vm = pltpu.MemorySpace.VMEM
    out = pl.pallas_call(
        fused_model_kernel,
        out_shape=jax.ShapeDtypeStruct((B_pad, 4), jnp.float32),
        in_specs=[pl.BlockSpec(memory_space=vm)] * 8,
        out_specs=pl.BlockSpec(memory_space=vm),
    )(tok_col, kp["combined"], kp["w_rec"], kp["w_head"], kp["b_head"],
      xa_t, offx, kp["offw"])
    return out[:B]


model_forward = jax.jit(_forward)


# ------------------------------ raw params (PyTorch-like) -------------------------- #
def init_raw_params(key, vocab, emb_dim, hidden, anc_dim):
    H, E = hidden, emb_dim
    ks = iter(jax.random.split(key, 24))
    emb = jax.random.uniform(next(ks), (vocab, E), jnp.float32, -0.5, 0.5)
    emb = emb.at[0].set(0.0)                      # padding_idx=0 row is zero
    scale = 1.0 / np.sqrt(H)

    def u(k, shape):
        return jax.random.uniform(k, shape, jnp.float32, -scale, scale)

    lstms = []
    for _ in range(3):                            # order: s_lstm, t_lstm, o_lstm
        lstms.append(dict(
            w_ih=u(next(ks), (4 * H, E)), w_hh=u(next(ks), (4 * H, H)),
            b_ih=u(next(ks), (4 * H,)), b_hh=u(next(ks), (4 * H,))))

    ws = u(next(ks), (anc_dim, H)); bs = u(next(ks), (anc_dim,))
    wt = u(next(ks), (anc_dim, H)); bt = u(next(ks), (anc_dim,))
    wo = u(next(ks), (9, H));       bo = u(next(ks), (9,))

    T = 0.166                                     # fixed, non-trainable OffsetNet table
    offw = jnp.array([[-T, -T], [-T, 0.0], [-T, T], [0.0, -T], [0.0, T],
                      [T, -T], [T, 0.0], [T, T], [0.0, 0.0]], dtype=jnp.float32)
    return dict(emb=emb, lstms=lstms, ws=ws, bs=bs, wt=wt, bt=bt, wo=wo, bo=bo, offw=offw)


# --------------------- pack raw params into the fused kernel layout ---------------- #
def pack_params(raw):
    emb = np.asarray(raw["emb"])
    vocab, E = emb.shape
    H = raw["lstms"][0]["w_hh"].shape[1]
    anc = raw["ws"].shape[0]
    n_off = raw["wo"].shape[0]

    GP = ((3 * H + 127) // 128) * 128             # padded fused hidden width (128)
    GW = 4 * GP                                   # gate-major: [I | F | G | O]
    NH = ((2 * anc + n_off + 127) // 128) * 128   # padded head width (128)

    # NOTE: all padded rows/columns below MUST stay exactly zero (see invariant at top of file).
    w_in = np.zeros((E, GW), np.float32)
    w_rec = np.zeros((GP, GW), np.float32)
    b_in = np.zeros((1, GW), np.float32)
    for l, p in enumerate(raw["lstms"]):
        w_ih = np.asarray(p["w_ih"]); w_hh = np.asarray(p["w_hh"])
        b = np.asarray(p["b_ih"]) + np.asarray(p["b_hh"])
        for g in range(4):                        # PyTorch gate order: i, f, g, o
            rows = slice(g * H, (g + 1) * H)
            col = g * GP + l * H
            w_in[:, col:col + H] = w_ih[rows, :].T
            w_rec[l * H:(l + 1) * H, col:col + H] = w_hh[rows, :].T
            b_in[0, col:col + H] = b[rows]

    # pre-fold the embedding into the input projection; last row carries the fused gate bias
    combined = np.zeros((vocab + 1, GW), np.float32)
    combined[:vocab, :] = emb.astype(np.float32) @ w_in
    combined[vocab, :] = b_in[0]

    w_head = np.zeros((GP, NH), np.float32)
    b_head = np.zeros((1, NH), np.float32)
    w_head[0:H, 0:anc] = np.asarray(raw["ws"]).T;              b_head[0, 0:anc] = np.asarray(raw["bs"])
    w_head[H:2 * H, anc:2 * anc] = np.asarray(raw["wt"]).T;    b_head[0, anc:2 * anc] = np.asarray(raw["bt"])
    w_head[2 * H:3 * H, 2 * anc:2 * anc + n_off] = np.asarray(raw["wo"]).T
    b_head[0, 2 * anc:2 * anc + n_off] = np.asarray(raw["bo"])

    return dict(combined=jnp.asarray(combined), w_rec=jnp.asarray(w_rec),
                w_head=jnp.asarray(w_head), b_head=jnp.asarray(b_head),
                offw=jnp.asarray(raw["offw"]))


# ------------------------------- pure-JAX reference -------------------------------- #
def model_ref(s_tokens, x, raw):
    e = jnp.transpose(jnp.take(raw["emb"], s_tokens, axis=0), (1, 0, 2))  # (S, B, E)

    def run_lstm(p):
        w_ih, w_hh, b_ih, b_hh = p["w_ih"], p["w_hh"], p["b_ih"], p["b_hh"]
        H = w_hh.shape[1]; B = e.shape[1]

        def step(carry, x_t):
            h, c = carry
            g = x_t @ w_ih.T + h @ w_hh.T + b_ih + b_hh
            i = jax.nn.sigmoid(g[:, :H]); f = jax.nn.sigmoid(g[:, H:2 * H])
            gg = jnp.tanh(g[:, 2 * H:3 * H]); o = jax.nn.sigmoid(g[:, 3 * H:])
            c = f * c + i * gg
            h = o * jnp.tanh(c)
            return (h, c), None

        (h, _), _ = lax.scan(step, (jnp.zeros((B, H)), jnp.zeros((B, H))), e)
        return h

    hs, ht, ho = (run_lstm(p) for p in raw["lstms"])
    anc = raw["ws"].shape[0]
    xa = x[:, :anc, :]
    offx = x[:, anc, 0:1]
    a_s = jax.nn.softmax(hs @ raw["ws"].T + raw["bs"], axis=1)
    a_t = jax.nn.softmax(ht @ raw["wt"].T + raw["bt"], axis=1)
    a_o = jax.nn.softmax(ho @ raw["wo"].T + raw["bo"], axis=1)
    s_out = jnp.einsum("ba,bad->bd", a_s, xa)
    t_anc = jnp.einsum("ba,bad->bd", a_t, xa)
    t_off = offx * (a_o @ raw["offw"])
    return jnp.concatenate([s_out, t_anc + t_off], axis=1)


# ------------------------------------- main ---------------------------------------- #
if __name__ == "__main__":
    BATCH, SEQ = 2, 8
    EMB_DIM, OUT_DIM, ANC_DIM, VOCAB = 32, 32, 25, 50

    key = jax.random.PRNGKey(0)
    k_par, k_s, k_x = jax.random.split(key, 3)

    raw = init_raw_params(k_par, VOCAB, EMB_DIM, OUT_DIM, ANC_DIM)
    kparams = pack_params(raw)

    s_tokens = jax.random.randint(k_s, (BATCH, SEQ), 0, VOCAB, dtype=jnp.int32)
    x_state = jax.random.uniform(k_x, (BATCH, ANC_DIM + 1, 2), jnp.float32, -1.0, 1.0)

    out = jax.block_until_ready(model_forward(s_tokens, x_state, kparams))
    ref = jax.block_until_ready(model_ref(s_tokens, x_state, raw))

    assert out.shape == (BATCH, 4)
    np.testing.assert_allclose(np.asarray(out), np.asarray(ref), rtol=2e-3, atol=1e-4)

    print("KERNEL_OK")
</pallas_src>

<mosaic_0001>
module attributes {stable_mosaic.version = 11 : i64} {
  func.func @fused_model_kernel(%arg0: memref<64x1xi32, #tpu.memory_space<vmem>>, %arg1: memref<51x512xf32, #tpu.memory_space<vmem>>, %arg2: memref<128x512xf32, #tpu.memory_space<vmem>>, %arg3: memref<128x128xf32, #tpu.memory_space<vmem>>, %arg4: memref<1x128xf32, #tpu.memory_space<vmem>>, %arg5: memref<8x2x25xf32, #tpu.memory_space<vmem>>, %arg6: memref<8x1xf32, #tpu.memory_space<vmem>>, %arg7: memref<9x2xf32, #tpu.memory_space<vmem>>, %arg8: memref<8x4xf32, #tpu.memory_space<vmem>>) attributes {dimension_semantics = [], scalar_prefetch = 0 : i64, scratch_operands = 0 : i64, tpu.core_type = #tpu.core_type<tc>} {
    %c0 = arith.constant 0 : index
    %c0_0 = arith.constant 0 : index
    %0 = vector.load %arg0[%c0, %c0_0] : memref<64x1xi32, #tpu.memory_space<vmem>>, vector<64x1xi32>
    %1 = tpu.iota {dimensions = array<i32: 1>} : vector<64x51xi32>
    %2 = vector.broadcast %0 : vector<64x1xi32> to vector<64x51xi32>
    %3 = arith.cmpi eq, %1, %2 : vector<64x51xi32>
    %c50_i32 = arith.constant 50 : i32
    %4 = vector.broadcast %c50_i32 : i32 to vector<64x51xi32>
    %5 = arith.cmpi eq, %1, %4 : vector<64x51xi32>
    %6 = arith.ori %3, %5 : vector<64x51xi1>
    %7 = arith.extui %6 : vector<64x51xi1> to vector<64x51xi32>
    %8 = arith.sitofp %7 : vector<64x51xi32> to vector<64x51xf32>
    %c0_1 = arith.constant 0 : index
    %c0_2 = arith.constant 0 : index
    %9 = vector.load %arg1[%c0_1, %c0_2] : memref<51x512xf32, #tpu.memory_space<vmem>>, vector<51x512xf32>
    %cst = arith.constant dense<0.000000e+00> : vector<64x512xf32>
    %10 = tpu.matmul %8, %9, %cst {dimension_numbers = #tpu.dot_dimension_numbers<[1], [0], [0], [1], [0, 0, 1, 1], [], []>} : vector<64x51xf32>, vector<51x512xf32>, vector<64x512xf32> -> vector<64x512xf32>
    %c0_3 = arith.constant 0 : index
    %c0_4 = arith.constant 0 : index
    %11 = vector.load %arg2[%c0_3, %c0_4] : memref<128x512xf32, #tpu.memory_space<vmem>>, vector<128x512xf32>
    %12 = vector.extract_strided_slice %10 {offsets = [0, 0], sizes = [8, 512], strides = [1, 1]} : vector<64x512xf32> to vector<8x512xf32>
    %13 = vector.extract_strided_slice %12 {offsets = [0, 0], sizes = [8, 128], strides = [1, 1]} : vector<8x512xf32> to vector<8x128xf32>
    %cst_5 = arith.constant 5.000000e-01 : f32
    %14 = vector.broadcast %cst_5 : f32 to vector<8x128xf32>
    %15 = arith.mulf %14, %13 : vector<8x128xf32>
    %16 = math.tanh %15 : vector<8x128xf32>
    %cst_6 = arith.constant 5.000000e-01 : f32
    %17 = vector.broadcast %cst_6 : f32 to vector<8x128xf32>
    %18 = arith.mulf %17, %16 : vector<8x128xf32>
    %cst_7 = arith.constant 5.000000e-01 : f32
    %19 = vector.broadcast %cst_7 : f32 to vector<8x128xf32>
    %20 = arith.addf %18, %19 : vector<8x128xf32>
    %21 = vector.extract_strided_slice %12 {offsets = [0, 256], sizes = [8, 128], strides = [1, 1]} : vector<8x512xf32> to vector<8x128xf32>
    %22 = math.tanh %21 : vector<8x128xf32>
    %23 = arith.mulf %20, %22 : vector<8x128xf32>
    %24 = vector.extract_strided_slice %12 {offsets = [0, 384], sizes = [8, 128], strides = [1, 1]} : vector<8x512xf32> to vector<8x128xf32>
    %cst_8 = arith.constant 5.000000e-01 : f32
    %25 = vector.broadcast %cst_8 : f32 to vector<8x128xf32>
    %26 = arith.mulf %25, %24 : vector<8x128xf32>
    %27 = math.tanh %26 : vector<8x128xf32>
    %cst_9 = arith.constant 5.000000e-01 : f32
    %28 = vector.broadcast %cst_9 : f32 to vector<8x128xf32>
    %29 = arith.mulf %28, %27 : vector<8x128xf32>
    %cst_10 = arith.constant 5.000000e-01 : f32
    %30 = vector.broadcast %cst_10 : f32 to vector<8x128xf32>
    %31 = arith.addf %29, %30 : vector<8x128xf32>
    %32 = math.tanh %23 : vector<8x128xf32>
    %33 = arith.mulf %31, %32 : vector<8x128xf32>
    %34 = vector.extract_strided_slice %10 {offsets = [8, 0], sizes = [8, 512], strides = [1, 1]} : vector<64x512xf32> to vector<8x512xf32>
    %cst_11 = arith.constant dense<0.000000e+00> : vector<8x512xf32>
    %35 = tpu.matmul %33, %11, %cst_11 {dimension_numbers = #tpu.dot_dimension_numbers<[1], [0], [0], [1], [0, 0, 1, 1], [], []>} : vector<8x128xf32>, vector<128x512xf32>, vector<8x512xf32> -> vector<8x512xf32>
    %36 = arith.addf %34, %35 : vector<8x512xf32>
    %37 = vector.extract_strided_slice %36 {offsets = [0, 0], sizes = [8, 128], strides = [1, 1]} : vector<8x512xf32> to vector<8x128xf32>
    %cst_12 = arith.constant 5.000000e-01 : f32
    %38 = vector.broadcast %cst_12 : f32 to vector<8x128xf32>
    %39 = arith.mulf %38, %37 : vector<8x128xf32>
    %40 = math.tanh %39 : vector<8x128xf32>
    %cst_13 = arith.constant 5.000000e-01 : f32
    %41 = vector.broadcast %cst_13 : f32 to vector<8x128xf32>
    %42 = arith.mulf %41, %40 : vector<8x128xf32>
    %cst_14 = arith.constant 5.000000e-01 : f32
    %43 = vector.broadcast %cst_14 : f32 to vector<8x128xf32>
    %44 = arith.addf %42, %43 : vector<8x128xf32>
    %45 = vector.extract_strided_slice %36 {offsets = [0, 128], sizes = [8, 128], strides = [1, 1]} : vector<8x512xf32> to vector<8x128xf32>
    %cst_15 = arith.constant 5.000000e-01 : f32
    %46 = vector.broadcast %cst_15 : f32 to vector<8x128xf32>
    %47 = arith.mulf %46, %45 : vector<8x128xf32>
    %48 = math.tanh %47 : vector<8x128xf32>
    %cst_16 = arith.constant 5.000000e-01 : f32
    %49 = vector.broadcast %cst_16 : f32 to vector<8x128xf32>
    %50 = arith.mulf %49, %48 : vector<8x128xf32>
    %cst_17 = arith.constant 5.000000e-01 : f32
    %51 = vector.broadcast %cst_17 : f32 to vector<8x128xf32>
    %52 = arith.addf %50, %51 : vector<8x128xf32>
    %53 = vector.extract_strided_slice %36 {offsets = [0, 256], sizes = [8, 128], strides = [1, 1]} : vector<8x512xf32> to vector<8x128xf32>
    %54 = math.tanh %53 : vector<8x128xf32>
    %55 = vector.extract_strided_slice %36 {offsets = [0, 384], sizes = [8, 128], strides = [1, 1]} : vector<8x512xf32> to vector<8x128xf32>
    %cst_18 = arith.constant 5.000000e-01 : f32
    %56 = vector.broadcast %cst_18 : f32 to vector<8x128xf32>
    %57 = arith.mulf %56, %55 : vector<8x128xf32>
    %58 = math.tanh %57 : vector<8x128xf32>
    %cst_19 = arith.constant 5.000000e-01 : f32
    %59 = vector.broadcast %cst_19 : f32 to vector<8x128xf32>
    %60 = arith.mulf %59, %58 : vector<8x128xf32>
    %cst_20 = arith.constant 5.000000e-01 : f32
    %61 = vector.broadcast %cst_20 : f32 to vector<8x128xf32>
    %62 = arith.addf %60, %61 : vector<8x128xf32>
    %63 = arith.mulf %52, %23 : vector<8x128xf32>
    %64 = arith.mulf %44, %54 : vector<8x128xf32>
    %65 = arith.addf %63, %64 : vector<8x128xf32>
    %66 = math.tanh %65 : vector<8x128xf32>
    %67 = arith.mulf %62, %66 : vector<8x128xf32>
    %68 = vector.extract_strided_slice %10 {offsets = [16, 0], sizes = [8, 512], strides = [1, 1]} : vector<64x512xf32> to vector<8x512xf32>
    %cst_21 = arith.constant dense<0.000000e+00> : vector<8x512xf32>
    %69 = tpu.matmul %67, %11, %cst_21 {dimension_numbers = #tpu.dot_dimension_numbers<[1], [0], [0], [1], [0, 0, 1, 1], [], []>} : vector<8x128xf32>, vector<128x512xf32>, vector<8x512xf32> -> vector<8x512xf32>
    %70 = arith.addf %68, %69 : vector<8x512xf32>
    %71 = vector.extract_strided_slice %70 {offsets = [0, 0], sizes = [8, 128], strides = [1, 1]} : vector<8x512xf32> to vector<8x128xf32>
    %cst_22 = arith.constant 5.000000e-01 : f32
    %72 = vector.broadcast %cst_22 : f32 to vector<8x128xf32>
    %73 = arith.mulf %72, %71 : vector<8x128xf32>
    %74 = math.tanh %73 : vector<8x128xf32>
    %cst_23 = arith.constant 5.000000e-01 : f32
    %75 = vector.broadcast %cst_23 : f32 to vector<8x128xf32>
    %76 = arith.mulf %75, %74 : vector<8x128xf32>
    %cst_24 = arith.constant 5.000000e-01 : f32
    %77 = vector.broadcast %cst_24 : f32 to vector<8x128xf32>
    %78 = arith.addf %76, %77 : vector<8x128xf32>
    %79 = vector.extract_strided_slice %70 {offsets = [0, 128], sizes = [8, 128], strides = [1, 1]} : vector<8x512xf32> to vector<8x128xf32>
    %cst_25 = arith.constant 5.000000e-01 : f32
    %80 = vector.broadcast %cst_25 : f32 to vector<8x128xf32>
    %81 = arith.mulf %80, %79 : vector<8x128xf32>
    %82 = math.tanh %81 : vector<8x128xf32>
    %cst_26 = arith.constant 5.000000e-01 : f32
    %83 = vector.broadcast %cst_26 : f32 to vector<8x128xf32>
    %84 = arith.mulf %83, %82 : vector<8x128xf32>
    %cst_27 = arith.constant 5.000000e-01 : f32
    %85 = vector.broadcast %cst_27 : f32 to vector<8x128xf32>
    %86 = arith.addf %84, %85 : vector<8x128xf32>
    %87 = vector.extract_strided_slice %70 {offsets = [0, 256], sizes = [8, 128], strides = [1, 1]} : vector<8x512xf32> to vector<8x128xf32>
    %88 = math.tanh %87 : vector<8x128xf32>
    %89 = vector.extract_strided_slice %70 {offsets = [0, 384], sizes = [8, 128], strides = [1, 1]} : vector<8x512xf32> to vector<8x128xf32>
    %cst_28 = arith.constant 5.000000e-01 : f32
    %90 = vector.broadcast %cst_28 : f32 to vector<8x128xf32>
    %91 = arith.mulf %90, %89 : vector<8x128xf32>
    %92 = math.tanh %91 : vector<8x128xf32>
    %cst_29 = arith.constant 5.000000e-01 : f32
    %93 = vector.broadcast %cst_29 : f32 to vector<8x128xf32>
    %94 = arith.mulf %93, %92 : vector<8x128xf32>
    %cst_30 = arith.constant 5.000000e-01 : f32
    %95 = vector.broadcast %cst_30 : f32 to vector<8x128xf32>
    %96 = arith.addf %94, %95 : vector<8x128xf32>
    %97 = arith.mulf %86, %65 : vector<8x128xf32>
    %98 = arith.mulf %78, %88 : vector<8x128xf32>
    %99 = arith.addf %97, %98 : vector<8x128xf32>
    %100 = math.tanh %99 : vector<8x128xf32>
    %101 = arith.mulf %96, %100 : vector<8x128xf32>
    %102 = vector.extract_strided_slice %10 {offsets = [24, 0], sizes = [8, 512], strides = [1, 1]} : vector<64x512xf32> to vector<8x512xf32>
    %cst_31 = arith.constant dense<0.000000e+00> : vector<8x512xf32>
    %103 = tpu.matmul %101, %11, %cst_31 {dimension_numbers = #tpu.dot_dimension_numbers<[1], [0], [0], [1], [0, 0, 1, 1], [], []>} : vector<8x128xf32>, vector<128x512xf32>, vector<8x512xf32> -> vector<8x512xf32>
    %104 = arith.addf %102, %103 : vector<8x512xf32>
    %105 = vector.extract_strided_slice %104 {offsets = [0, 0], sizes = [8, 128], strides = [1, 1]} : vector<8x512xf32> to vector<8x128xf32>
    %cst_32 = arith.constant 5.000000e-01 : f32
    %106 = vector.broadcast %cst_32 : f32 to vector<8x128xf32>
    %107 = arith.mulf %106, %105 : vector<8x128xf32>
    %108 = math.tanh %107 : vector<8x128xf32>
    %cst_33 = arith.constant 5.000000e-01 : f32
    %109 = vector.broadcast %cst_33 : f32 to vector<8x128xf32>
    %110 = arith.mulf %109, %108 : vector<8x128xf32>
    %cst_34 = arith.constant 5.000000e-01 : f32
    %111 = vector.broadcast %cst_34 : f32 to vector<8x128xf32>
    %112 = arith.addf %110, %111 : vector<8x128xf32>
    %113 = vector.extract_strided_slice %104 {offsets = [0, 128], sizes = [8, 128], strides = [1, 1]} : vector<8x512xf32> to vector<8x128xf32>
    %cst_35 = arith.constant 5.000000e-01 : f32
    %114 = vector.broadcast %cst_35 : f32 to vector<8x128xf32>
    %115 = arith.mulf %114, %113 : vector<8x128xf32>
    %116 = math.tanh %115 : vector<8x128xf32>
    %cst_36 = arith.constant 5.000000e-01 : f32
    %117 = vector.broadcast %cst_36 : f32 to vector<8x128xf32>
    %118 = arith.mulf %117, %116 : vector<8x128xf32>
    %cst_37 = arith.constant 5.000000e-01 : f32
    %119 = vector.broadcast %cst_37 : f32 to vector<8x128xf32>
    %120 = arith.addf %118, %119 : vector<8x128xf32>
    %121 = vector.extract_strided_slice %104 {offsets = [0, 256], sizes = [8, 128], strides = [1, 1]} : vector<8x512xf32> to vector<8x128xf32>
    %122 = math.tanh %121 : vector<8x128xf32>
    %123 = vector.extract_strided_slice %104 {offsets = [0, 384], sizes = [8, 128], strides = [1, 1]} : vector<8x512xf32> to vector<8x128xf32>
    %cst_38 = arith.constant 5.000000e-01 : f32
    %124 = vector.broadcast %cst_38 : f32 to vector<8x128xf32>
    %125 = arith.mulf %124, %123 : vector<8x128xf32>
    %126 = math.tanh %125 : vector<8x128xf32>
    %cst_39 = arith.constant 5.000000e-01 : f32
    %127 = vector.broadcast %cst_39 : f32 to vector<8x128xf32>
    %128 = arith.mulf %127, %126 : vector<8x128xf32>
    %cst_40 = arith.constant 5.000000e-01 : f32
    %129 = vector.broadcast %cst_40 : f32 to vector<8x128xf32>
    %130 = arith.addf %128, %129 : vector<8x128xf32>
    %131 = arith.mulf %120, %99 : vector<8x128xf32>
    %132 = arith.mulf %112, %122 : vector<8x128xf32>
    %133 = arith.addf %131, %132 : vector<8x128xf32>
    %134 = math.tanh %133 : vector<8x128xf32>
    %135 = arith.mulf %130, %134 : vector<8x128xf32>
    %136 = vector.extract_strided_slice %10 {offsets = [32, 0], sizes = [8, 512], strides = [1, 1]} : vector<64x512xf32> to vector<8x512xf32>
    %cst_41 = arith.constant dense<0.000000e+00> : vector<8x512xf32>
    %137 = tpu.matmul %135, %11, %cst_41 {dimension_numbers = #tpu.dot_dimension_numbers<[1], [0], [0], [1], [0, 0, 1, 1], [], []>} : vector<8x128xf32>, vector<128x512xf32>, vector<8x512xf32> -> vector<8x512xf32>
    %138 = arith.addf %136, %137 : vector<8x512xf32>
    %139 = vector.extract_strided_slice %138 {offsets = [0, 0], sizes = [8, 128], strides = [1, 1]} : vector<8x512xf32> to vector<8x128xf32>
    %cst_42 = arith.constant 5.000000e-01 : f32
    %140 = vector.broadcast %cst_42 : f32 to vector<8x128xf32>
    %141 = arith.mulf %140, %139 : vector<8x128xf32>
    %142 = math.tanh %141 : vector<8x128xf32>
    %cst_43 = arith.constant 5.000000e-01 : f32
    %143 = vector.broadcast %cst_43 : f32 to vector<8x128xf32>
    %144 = arith.mulf %143, %142 : vector<8x128xf32>
    %cst_44 = arith.constant 5.000000e-01 : f32
    %145 = vector.broadcast %cst_44 : f32 to vector<8x128xf32>
    %146 = arith.addf %144, %145 : vector<8x128xf32>
    %147 = vector.extract_strided_slice %138 {offsets = [0, 128], sizes = [8, 128], strides = [1, 1]} : vector<8x512xf32> to vector<8x128xf32>
    %cst_45 = arith.constant 5.000000e-01 : f32
    %148 = vector.broadcast %cst_45 : f32 to vector<8x128xf32>
    %149 = arith.mulf %148, %147 : vector<8x128xf32>
    %150 = math.tanh %149 : vector<8x128xf32>
    %cst_46 = arith.constant 5.000000e-01 : f32
    %151 = vector.broadcast %cst_46 : f32 to vector<8x128xf32>
    %152 = arith.mulf %151, %150 : vector<8x128xf32>
    %cst_47 = arith.constant 5.000000e-01 : f32
    %153 = vector.broadcast %cst_47 : f32 to vector<8x128xf32>
    %154 = arith.addf %152, %153 : vector<8x128xf32>
    %155 = vector.extract_strided_slice %138 {offsets = [0, 256], sizes = [8, 128], strides = [1, 1]} : vector<8x512xf32> to vector<8x128xf32>
    %156 = math.tanh %155 : vector<8x128xf32>
    %157 = vector.extract_strided_slice %138 {offsets = [0, 384], sizes = [8, 128], strides = [1, 1]} : vector<8x512xf32> to vector<8x128xf32>
    %cst_48 = arith.constant 5.000000e-01 : f32
    %158 = vector.broadcast %cst_48 : f32 to vector<8x128xf32>
    %159 = arith.mulf %158, %157 : vector<8x128xf32>
    %160 = math.tanh %159 : vector<8x128xf32>
    %cst_49 = arith.constant 5.000000e-01 : f32
    %161 = vector.broadcast %cst_49 : f32 to vector<8x128xf32>
    %162 = arith.mulf %161, %160 : vector<8x128xf32>
    %cst_50 = arith.constant 5.000000e-01 : f32
    %163 = vector.broadcast %cst_50 : f32 to vector<8x128xf32>
    %164 = arith.addf %162, %163 : vector<8x128xf32>
    %165 = arith.mulf %154, %133 : vector<8x128xf32>
    %166 = arith.mulf %146, %156 : vector<8x128xf32>
    %167 = arith.addf %165, %166 : vector<8x128xf32>
    %168 = math.tanh %167 : vector<8x128xf32>
    %169 = arith.mulf %164, %168 : vector<8x128xf32>
    %170 = vector.extract_strided_slice %10 {offsets = [40, 0], sizes = [8, 512], strides = [1, 1]} : vector<64x512xf32> to vector<8x512xf32>
    %cst_51 = arith.constant dense<0.000000e+00> : vector<8x512xf32>
    %171 = tpu.matmul %169, %11, %cst_51 {dimension_numbers = #tpu.dot_dimension_numbers<[1], [0], [0], [1], [0, 0, 1, 1], [], []>} : vector<8x128xf32>, vector<128x512xf32>, vector<8x512xf32> -> vector<8x512xf32>
    %172 = arith.addf %170, %171 : vector<8x512xf32>
    %173 = vector.extract_strided_slice %172 {offsets = [0, 0], sizes = [8, 128], strides = [1, 1]} : vector<8x512xf32> to vector<8x128xf32>
    %cst_52 = arith.constant 5.000000e-01 : f32
    %174 = vector.broadcast %cst_52 : f32 to vector<8x128xf32>
    %175 = arith.mulf %174, %173 : vector<8x128xf32>
    %176 = math.tanh %175 : vector<8x128xf32>
    %cst_53 = arith.constant 5.000000e-01 : f32
    %177 = vector.broadcast %cst_53 : f32 to vector<8x128xf32>
    %178 = arith.mulf %177, %176 : vector<8x128xf32>
    %cst_54 = arith.constant 5.000000e-01 : f32
    %179 = vector.broadcast %cst_54 : f32 to vector<8x128xf32>
    %180 = arith.addf %178, %179 : vector<8x128xf32>
    %181 = vector.extract_strided_slice %172 {offsets = [0, 128], sizes = [8, 128], strides = [1, 1]} : vector<8x512xf32> to vector<8x128xf32>
    %cst_55 = arith.constant 5.000000e-01 : f32
    %182 = vector.broadcast %cst_55 : f32 to vector<8x128xf32>
    %183 = arith.mulf %182, %181 : vector<8x128xf32>
    %184 = math.tanh %183 : vector<8x128xf32>
    %cst_56 = arith.constant 5.000000e-01 : f32
    %185 = vector.broadcast %cst_56 : f32 to vector<8x128xf32>
    %186 = arith.mulf %185, %184 : vector<8x128xf32>
    %cst_57 = arith.constant 5.000000e-01 : f32
    %187 = vector.broadcast %cst_57 : f32 to vector<8x128xf32>
    %188 = arith.addf %186, %187 : vector<8x128xf32>
    %189 = vector.extract_strided_slice %172 {offsets = [0, 256], sizes = [8, 128], strides = [1, 1]} : vector<8x512xf32> to vector<8x128xf32>
    %190 = math.tanh %189 : vector<8x128xf32>
    %191 = vector.extract_strided_slice %172 {offsets = [0, 384], sizes = [8, 128], strides = [1, 1]} : vector<8x512xf32> to vector<8x128xf32>
    %cst_58 = arith.constant 5.000000e-01 : f32
    %192 = vector.broadcast %cst_58 : f32 to vector<8x128xf32>
    %193 = arith.mulf %192, %191 : vector<8x128xf32>
    %194 = math.tanh %193 : vector<8x128xf32>
    %cst_59 = arith.constant 5.000000e-01 : f32
    %195 = vector.broadcast %cst_59 : f32 to vector<8x128xf32>
    %196 = arith.mulf %195, %194 : vector<8x128xf32>
    %cst_60 = arith.constant 5.000000e-01 : f32
    %197 = vector.broadcast %cst_60 : f32 to vector<8x128xf32>
    %198 = arith.addf %196, %197 : vector<8x128xf32>
    %199 = arith.mulf %188, %167 : vector<8x128xf32>
    %200 = arith.mulf %180, %190 : vector<8x128xf32>
    %201 = arith.addf %199, %200 : vector<8x128xf32>
    %202 = math.tanh %201 : vector<8x128xf32>
    %203 = arith.mulf %198, %202 : vector<8x128xf32>
    %204 = vector.extract_strided_slice %10 {offsets = [48, 0], sizes = [8, 512], strides = [1, 1]} : vector<64x512xf32> to vector<8x512xf32>
    %cst_61 = arith.constant dense<0.000000e+00> : vector<8x512xf32>
    %205 = tpu.matmul %203, %11, %cst_61 {dimension_numbers = #tpu.dot_dimension_numbers<[1], [0], [0], [1], [0, 0, 1, 1], [], []>} : vector<8x128xf32>, vector<128x512xf32>, vector<8x512xf32> -> vector<8x512xf32>
    %206 = arith.addf %204, %205 : vector<8x512xf32>
    %207 = vector.extract_strided_slice %206 {offsets = [0, 0], sizes = [8, 128], strides = [1, 1]} : vector<8x512xf32> to vector<8x128xf32>
    %cst_62 = arith.constant 5.000000e-01 : f32
    %208 = vector.broadcast %cst_62 : f32 to vector<8x128xf32>
    %209 = arith.mulf %208, %207 : vector<8x128xf32>
    %210 = math.tanh %209 : vector<8x128xf32>
    %cst_63 = arith.constant 5.000000e-01 : f32
    %211 = vector.broadcast %cst_63 : f32 to vector<8x128xf32>
    %212 = arith.mulf %211, %210 : vector<8x128xf32>
    %cst_64 = arith.constant 5.000000e-01 : f32
    %213 = vector.broadcast %cst_64 : f32 to vector<8x128xf32>
    %214 = arith.addf %212, %213 : vector<8x128xf32>
    %215 = vector.extract_strided_slice %206 {offsets = [0, 128], sizes = [8, 128], strides = [1, 1]} : vector<8x512xf32> to vector<8x128xf32>
    %cst_65 = arith.constant 5.000000e-01 : f32
    %216 = vector.broadcast %cst_65 : f32 to vector<8x128xf32>
    %217 = arith.mulf %216, %215 : vector<8x128xf32>
    %218 = math.tanh %217 : vector<8x128xf32>
    %cst_66 = arith.constant 5.000000e-01 : f32
    %219 = vector.broadcast %cst_66 : f32 to vector<8x128xf32>
    %220 = arith.mulf %219, %218 : vector<8x128xf32>
    %cst_67 = arith.constant 5.000000e-01 : f32
    %221 = vector.broadcast %cst_67 : f32 to vector<8x128xf32>
    %222 = arith.addf %220, %221 : vector<8x128xf32>
    %223 = vector.extract_strided_slice %206 {offsets = [0, 256], sizes = [8, 128], strides = [1, 1]} : vector<8x512xf32> to vector<8x128xf32>
    %224 = math.tanh %223 : vector<8x128xf32>
    %225 = vector.extract_strided_slice %206 {offsets = [0, 384], sizes = [8, 128], strides = [1, 1]} : vector<8x512xf32> to vector<8x128xf32>
    %cst_68 = arith.constant 5.000000e-01 : f32
    %226 = vector.broadcast %cst_68 : f32 to vector<8x128xf32>
    %227 = arith.mulf %226, %225 : vector<8x128xf32>
    %228 = math.tanh %227 : vector<8x128xf32>
    %cst_69 = arith.constant 5.000000e-01 : f32
    %229 = vector.broadcast %cst_69 : f32 to vector<8x128xf32>
    %230 = arith.mulf %229, %228 : vector<8x128xf32>
    %cst_70 = arith.constant 5.000000e-01 : f32
    %231 = vector.broadcast %cst_70 : f32 to vector<8x128xf32>
    %232 = arith.addf %230, %231 : vector<8x128xf32>
    %233 = arith.mulf %222, %201 : vector<8x128xf32>
    %234 = arith.mulf %214, %224 : vector<8x128xf32>
    %235 = arith.addf %233, %234 : vector<8x128xf32>
    %236 = math.tanh %235 : vector<8x128xf32>
    %237 = arith.mulf %232, %236 : vector<8x128xf32>
    %238 = vector.extract_strided_slice %10 {offsets = [56, 0], sizes = [8, 512], strides = [1, 1]} : vector<64x512xf32> to vector<8x512xf32>
    %cst_71 = arith.constant dense<0.000000e+00> : vector<8x512xf32>
    %239 = tpu.matmul %237, %11, %cst_71 {dimension_numbers = #tpu.dot_dimension_numbers<[1], [0], [0], [1], [0, 0, 1, 1], [], []>} : vector<8x128xf32>, vector<128x512xf32>, vector<8x512xf32> -> vector<8x512xf32>
    %240 = arith.addf %238, %239 : vector<8x512xf32>
    %241 = vector.extract_strided_slice %240 {offsets = [0, 0], sizes = [8, 128], strides = [1, 1]} : vector<8x512xf32> to vector<8x128xf32>
    %cst_72 = arith.constant 5.000000e-01 : f32
    %242 = vector.broadcast %cst_72 : f32 to vector<8x128xf32>
    %243 = arith.mulf %242, %241 : vector<8x128xf32>
    %244 = math.tanh %243 : vector<8x128xf32>
    %cst_73 = arith.constant 5.000000e-01 : f32
    %245 = vector.broadcast %cst_73 : f32 to vector<8x128xf32>
    %246 = arith.mulf %245, %244 : vector<8x128xf32>
    %cst_74 = arith.constant 5.000000e-01 : f32
    %247 = vector.broadcast %cst_74 : f32 to vector<8x128xf32>
    %248 = arith.addf %246, %247 : vector<8x128xf32>
    %249 = vector.extract_strided_slice %240 {offsets = [0, 128], sizes = [8, 128], strides = [1, 1]} : vector<8x512xf32> to vector<8x128xf32>
    %cst_75 = arith.constant 5.000000e-01 : f32
    %250 = vector.broadcast %cst_75 : f32 to vector<8x128xf32>
    %251 = arith.mulf %250, %249 : vector<8x128xf32>
    %252 = math.tanh %251 : vector<8x128xf32>
    %cst_76 = arith.constant 5.000000e-01 : f32
    %253 = vector.broadcast %cst_76 : f32 to vector<8x128xf32>
    %254 = arith.mulf %253, %252 : vector<8x128xf32>
    %cst_77 = arith.constant 5.000000e-01 : f32
    %255 = vector.broadcast %cst_77 : f32 to vector<8x128xf32>
    %256 = arith.addf %254, %255 : vector<8x128xf32>
    %257 = vector.extract_strided_slice %240 {offsets = [0, 256], sizes = [8, 128], strides = [1, 1]} : vector<8x512xf32> to vector<8x128xf32>
    %258 = math.tanh %257 : vector<8x128xf32>
    %259 = vector.extract_strided_slice %240 {offsets = [0, 384], sizes = [8, 128], strides = [1, 1]} : vector<8x512xf32> to vector<8x128xf32>
    %cst_78 = arith.constant 5.000000e-01 : f32
    %260 = vector.broadcast %cst_78 : f32 to vector<8x128xf32>
    %261 = arith.mulf %260, %259 : vector<8x128xf32>
    %262 = math.tanh %261 : vector<8x128xf32>
    %cst_79 = arith.constant 5.000000e-01 : f32
    %263 = vector.broadcast %cst_79 : f32 to vector<8x128xf32>
    %264 = arith.mulf %263, %262 : vector<8x128xf32>
    %cst_80 = arith.constant 5.000000e-01 : f32
    %265 = vector.broadcast %cst_80 : f32 to vector<8x128xf32>
    %266 = arith.addf %264, %265 : vector<8x128xf32>
    %267 = arith.mulf %256, %235 : vector<8x128xf32>
    %268 = arith.mulf %248, %258 : vector<8x128xf32>
    %269 = arith.addf %267, %268 : vector<8x128xf32>
    %270 = math.tanh %269 : vector<8x128xf32>
    %271 = arith.mulf %266, %270 : vector<8x128xf32>
    %c0_81 = arith.constant 0 : index
    %c0_82 = arith.constant 0 : index
    %272 = vector.load %arg3[%c0_81, %c0_82] : memref<128x128xf32, #tpu.memory_space<vmem>>, vector<128x128xf32>
    %cst_83 = arith.constant dense<0.000000e+00> : vector<8x128xf32>
    %273 = tpu.matmul %271, %272, %cst_83 {dimension_numbers = #tpu.dot_dimension_numbers<[1], [0], [0], [1], [0, 0, 1, 1], [], []>} : vector<8x128xf32>, vector<128x128xf32>, vector<8x128xf32> -> vector<8x128xf32>
    %c0_84 = arith.constant 0 : index
    %c0_85 = arith.constant 0 : index
    %274 = vector.load %arg4[%c0_84, %c0_85] : memref<1x128xf32, #tpu.memory_space<vmem>>, vector<1x128xf32>
    %275 = vector.broadcast %274 : vector<1x128xf32> to vector<8x128xf32>
    %276 = arith.addf %273, %275 : vector<8x128xf32>
    %277 = vector.extract_strided_slice %276 {offsets = [0, 0], sizes = [8, 25], strides = [1, 1]} : vector<8x128xf32> to vector<8x25xf32>
    %cst_86 = arith.constant dense<0xFF800000> : vector<8xf32>
    %278 = vector.multi_reduction <maximumf>, %277, %cst_86 [1] : vector<8x25xf32> to vector<8xf32>
    %279 = vector.shape_cast %278 : vector<8xf32> to vector<8x1xf32>
    %280 = vector.broadcast %279 : vector<8x1xf32> to vector<8x25xf32>
    %281 = arith.subf %277, %280 : vector<8x25xf32>
    %282 = math.exp %281 : vector<8x25xf32>
    %cst_87 = arith.constant dense<0.000000e+00> : vector<8xf32>
    %283 = vector.multi_reduction <add>, %282, %cst_87 [1] : vector<8x25xf32> to vector<8xf32>
    %284 = vector.shape_cast %283 : vector<8xf32> to vector<8x1xf32>
    %285 = vector.broadcast %284 : vector<8x1xf32> to vector<8x25xf32>
    %286 = arith.divf %282, %285 : vector<8x25xf32>
    %287 = vector.extract_strided_slice %276 {offsets = [0, 25], sizes = [8, 25], strides = [1, 1]} : vector<8x128xf32> to vector<8x25xf32>
    %cst_88 = arith.constant dense<0xFF800000> : vector<8xf32>
    %288 = vector.multi_reduction <maximumf>, %287, %cst_88 [1] : vector<8x25xf32> to vector<8xf32>
    %289 = vector.shape_cast %288 : vector<8xf32> to vector<8x1xf32>
    %290 = vector.broadcast %289 : vector<8x1xf32> to vector<8x25xf32>
    %291 = arith.subf %287, %290 : vector<8x25xf32>
    %292 = math.exp %291 : vector<8x25xf32>
    %cst_89 = arith.constant dense<0.000000e+00> : vector<8xf32>
    %293 = vector.multi_reduction <add>, %292, %cst_89 [1] : vector<8x25xf32> to vector<8xf32>
    %294 = vector.shape_cast %293 : vector<8xf32> to vector<8x1xf32>
    %295 = vector.broadcast %294 : vector<8x1xf32> to vector<8x25xf32>
    %296 = arith.divf %292, %295 : vector<8x25xf32>
    %297 = vector.extract_strided_slice %276 {offsets = [0, 50], sizes = [8, 9], strides = [1, 1]} : vector<8x128xf32> to vector<8x9xf32>
    %cst_90 = arith.constant dense<0xFF800000> : vector<8xf32>
    %298 = vector.multi_reduction <maximumf>, %297, %cst_90 [1] : vector<8x9xf32> to vector<8xf32>
    %299 = vector.shape_cast %298 : vector<8xf32> to vector<8x1xf32>
    %300 = vector.broadcast %299 : vector<8x1xf32> to vector<8x9xf32>
    %301 = arith.subf %297, %300 : vector<8x9xf32>
    %302 = math.exp %301 : vector<8x9xf32>
    %cst_91 = arith.constant dense<0.000000e+00> : vector<8xf32>
    %303 = vector.multi_reduction <add>, %302, %cst_91 [1] : vector<8x9xf32> to vector<8xf32>
    %304 = vector.shape_cast %303 : vector<8xf32> to vector<8x1xf32>
    %305 = vector.broadcast %304 : vector<8x1xf32> to vector<8x9xf32>
    %306 = arith.divf %302, %305 : vector<8x9xf32>
    %c0_92 = arith.constant 0 : index
    %c0_93 = arith.constant 0 : index
    %c0_94 = arith.constant 0 : index
    %307 = vector.load %arg5[%c0_92, %c0_93, %c0_94] : memref<8x2x25xf32, #tpu.memory_space<vmem>>, vector<8x2x25xf32>
    %308 = vector.shape_cast %286 : vector<8x25xf32> to vector<8x1x25xf32>
    %309 = vector.broadcast %308 : vector<8x1x25xf32> to vector<8x2x25xf32>
    %310 = arith.mulf %309, %307 : vector<8x2x25xf32>
    %cst_95 = arith.constant dense<0.000000e+00> : vector<8x2xf32>
    %311 = vector.multi_reduction <add>, %310, %cst_95 [2] : vector<8x2x25xf32> to vector<8x2xf32>
    %312 = vector.shape_cast %296 : vector<8x25xf32> to vector<8x1x25xf32>
    %313 = vector.broadcast %312 : vector<8x1x25xf32> to vector<8x2x25xf32>
    %314 = arith.mulf %313, %307 : vector<8x2x25xf32>
    %cst_96 = arith.constant dense<0.000000e+00> : vector<8x2xf32>
    %315 = vector.multi_reduction <add>, %314, %cst_96 [2] : vector<8x2x25xf32> to vector<8x2xf32>
    %c0_97 = arith.constant 0 : index
    %c0_98 = arith.constant 0 : index
    %316 = vector.load %arg6[%c0_97, %c0_98] : memref<8x1xf32, #tpu.memory_space<vmem>>, vector<8x1xf32>
    %c0_99 = arith.constant 0 : index
    %c0_100 = arith.constant 0 : index
    %317 = vector.load %arg7[%c0_99, %c0_100] : memref<9x2xf32, #tpu.memory_space<vmem>>, vector<9x2xf32>
    %cst_101 = arith.constant dense<0.000000e+00> : vector<8x2xf32>
    %318 = tpu.matmul %306, %317, %cst_101 {dimension_numbers = #tpu.dot_dimension_numbers<[1], [0], [0], [1], [0, 0, 1, 1], [], []>} : vector<8x9xf32>, vector<9x2xf32>, vector<8x2xf32> -> vector<8x2xf32>
    %319 = vector.broadcast %316 : vector<8x1xf32> to vector<8x2xf32>
    %320 = arith.mulf %319, %318 : vector<8x2xf32>
    %c0_102 = arith.constant 0 : index
    %c0_103 = arith.constant 0 : index
    %321 = vector.load %arg8[%c0_102, %c0_103] : memref<8x4xf32, #tpu.memory_space<vmem>>, vector<8x2xf32>
    tpu.vector_store %arg8[%c0_102, %c0_103], %311 {strides = array<i32>} : memref<8x4xf32, #tpu.memory_space<vmem>>, vector<8x2xf32>,
    %322 = arith.addf %315, %320 : vector<8x2xf32>
    %c0_104 = arith.constant 0 : index
    %c2 = arith.constant 2 : index
    %323 = vector.load %arg8[%c0_104, %c2] : memref<8x4xf32, #tpu.memory_space<vmem>>, vector<8x2xf32>
    tpu.vector_store %arg8[%c0_104, %c2], %322 {strides = array<i32>} : memref<8x4xf32, #tpu.memory_space<vmem>>, vector<8x2xf32>,
    return
  }
}

</mosaic_0001>

<llo_original>
// kernel: _forward.1
$region0: #{_forward.1}
  #allocation0 [shape = 'u32[]', space=smem, size = 0x4, offset = 0x4, fixed_abs, tag = 'smem constant byte address 0x4 - core index']
  #allocation1 [shape = 'u32[144,128]{1,0:T(1,128)}', space=vmem, size = 0x12000, scoped, tag = 'internal scratch']
  %s0 = inlined_call_operand.vmem [shape: s32[64,1], index: 0, kind: input, shape index: {}]
  %s1 = inlined_call_operand.hbm [shape: f32[51,512], index: 1, kind: input, shape index: {}]
  %s2 = inlined_call_operand.hbm [shape: f32[128,512], index: 2, kind: input, shape index: {}]
  %s3 = inlined_call_operand.vmem [shape: f32[128,128], index: 3, kind: input, shape index: {}]
  %s4 = inlined_call_operand.vmem [shape: f32[1,128], index: 4, kind: input, shape index: {}]
  %s5 = inlined_call_operand.vmem [shape: f32[8,2,25], index: 5, kind: input, shape index: {}]
  %s6 = inlined_call_operand.vmem [shape: f32[8,1], index: 6, kind: input, shape index: {}]
  %s7 = inlined_call_operand.vmem [shape: f32[9,2], index: 7, kind: input, shape index: {}]
  %s8 = inlined_call_operand.vmem [shape: f32[8,4], index: 8, kind: output, shape index: {}]
  %s9 = sld [smem:[#allocation0]]
  $region50: #{_forward.1} parent=0
    _
  %s11 = ssub.s32 1, %s9
  %s12 = scalar_select 0, %s11, %s9
  $region1: #{_forward.1} parent=0
    #allocation2 [shape = 'u8[114688]{0}', space=vmem, size = 0x1c000, scoped, tag = 'input window, operand 1, single buffered']
    #allocation3 [shape = 's32[1]{0}', space=sflag, size = 0x4, scoped, tag = 'scoped memory for _forward.1']
    #allocation4 [shape = 'u8[262144]{0}', space=vmem, size = 0x40000, scoped, tag = 'input window, operand 2, single buffered']
    #allocation5 [shape = 's32[1]{0}', space=sflag, size = 0x4, scoped, tag = 'scoped memory for _forward.1']
    %13 = vsyncpa [#allocation3], 0
    %14 = vsyncpa [#allocation5], 0
    // Predicated region
    $region2: #{_forward.1} parent=1 // pred_check
      _
    $region3: #{_forward.1} parent=1 // pred_check_branch
      %16 = sbr.rel (0) target = $region5
    $region4: #{_forward.1} parent=1 // pred_region
      _
    $region5: #{_forward.1} parent=1 // pred_fallthru
      _
    // Predicated region
    $region6: #{_forward.1} parent=1 // pred_check
      _
    $region7: #{_forward.1} parent=1 // pred_check_branch
      %18 = sbr.rel (0) target = $region9
    $region8: #{_forward.1} parent=1 // pred_region
      %s20 = ssub.s32 3584, 3584
      %21 = vsyncadd [#allocation3], %s20
      %s22 = sshll.u32 [#allocation2], 4
      %s23 = int_to_ptr.vmem [resolvable:$true] %s22
      %28 = dma.hbm_to_vmem [thread:$0]  %s1, 3584, %s23, [#allocation3], 512, 512, 32
    $region9: #{_forward.1} parent=1 // pred_fallthru
      _
    // Predicated region
    $region10: #{_forward.1} parent=1 // pred_check
      _
    $region11: #{_forward.1} parent=1 // pred_check_branch
      %30 = sbr.rel (0) target = $region13
    $region12: #{_forward.1} parent=1 // pred_region
      %s32 = ssub.s32 8192, 8192
      %33 = vsyncadd [#allocation5], %s32
      %s34 = sshll.u32 [#allocation4], 4
      %s35 = int_to_ptr.vmem [resolvable:$true] %s34
      %40 = dma.hbm_to_vmem [thread:$0]  %s2, 8192, %s35, [#allocation5], 512, 512, 32
    $region13: #{_forward.1} parent=1 // pred_fallthru
      _
    // Predicated region
    $region14: #{_forward.1} parent=1 // pred_check
      _
    $region15: #{_forward.1} parent=1 // pred_check_branch
      %42 = sbr.rel (0) target = $region17
    $region16: #{_forward.1} parent=1 // pred_region
      _
    $region17: #{_forward.1} parent=1 // pred_fallthru
      _
    // Predicated region
    $region18: #{_forward.1} parent=1 // pred_check
      _
    $region19: #{_forward.1} parent=1 // pred_check_branch
      %44 = sbr.rel (0) target = $region21
    $region20: #{_forward.1} parent=1 // pred_region
      _
    $region21: #{_forward.1} parent=1 // pred_fallthru
      _
    // Predicated region
    $region22: #{_forward.1} parent=1 // pred_check
      _
    $region23: #{_forward.1} parent=1 // pred_check_branch
      %46 = sbr.rel (0) target = $region25
    $region24: #{_forward.1} parent=1 // pred_region
      _
    $region25: #{_forward.1} parent=1 // pred_fallthru
      _
    // Predicated region
    $region26: #{_forward.1} parent=1 // pred_check
      _
    $region27: #{_forward.1} parent=1 // pred_check_branch
      %48 = sbr.rel (0) target = $region29
    $region28: #{_forward.1} parent=1 // pred_region
      _
    $region29: #{_forward.1} parent=1 // pred_fallthru
      _
    // Predicated region
    $region30: #{_forward.1} parent=1 // pred_check
      _
    $region31: #{_forward.1} parent=1 // pred_check_branch
      %50 = sbr.rel (0) target = $region33
    $region32: #{_forward.1} parent=1 // pred_region
      _
    $region33: #{_forward.1} parent=1 // pred_fallthru
      _
    // Predicated region
    $region34: #{_forward.1} parent=1 // pred_check
      _
    $region35: #{_forward.1} parent=1 // pred_check_branch
      %52 = sbr.rel (0) target = $region37
    $region36: #{_forward.1} parent=1 // pred_region
      %53 = dma.done [#allocation3], 3584
    $region37: #{_forward.1} parent=1 // pred_fallthru
      _
    // Predicated region
    $region38: #{_forward.1} parent=1 // pred_check
      _
    $region39: #{_forward.1} parent=1 // pred_check_branch
      %55 = sbr.rel (0) target = $region41
    $region40: #{_forward.1} parent=1 // pred_region
      %56 = dma.done [#allocation5], 8192
    $region41: #{_forward.1} parent=1 // pred_fallthru
      _
    %v57 = vld [vmem:[%s0] sm:$0xff]
    %v58 = vld [vmem:[%s0 + $0x8] sm:$0xff]
    %v59 = vld [vmem:[%s0 + $0x10] sm:$0xff]
    %v60 = vld [vmem:[%s0 + $0x18] sm:$0xff]
    %v61 = vld [vmem:[%s0 + $0x20] sm:$0xff]
    %v62 = vld [vmem:[%s0 + $0x28] sm:$0xff]
    %v63 = vld [vmem:[%s0 + $0x30] sm:$0xff]
    %v64 = vld [vmem:[%s0 + $0x38] sm:$0xff]
    %v65 = vlaneseq
    %v66 = vand.u32 %v65, 127
    %67 = vset.pattern.permute.xlu0 0
    %68 = vperm.xlu0 %67, %v57
    %v69 = vpop.permute.xlu0 %68
    %70 = vset.pattern.permute.xlu0 0
    %71 = vperm.xlu0 %70, %v58
    %v72 = vpop.permute.xlu0 %71
    %73 = vset.pattern.permute.xlu0 0
    %74 = vperm.xlu0 %73, %v59
    %v75 = vpop.permute.xlu0 %74
    %76 = vset.pattern.permute.xlu0 0
    %77 = vperm.xlu0 %76, %v60
    %v78 = vpop.permute.xlu0 %77
    %79 = vset.pattern.permute.xlu0 0
    %80 = vperm.xlu0 %79, %v61
    %v81 = vpop.permute.xlu0 %80
    %82 = vset.pattern.permute.xlu0 0
    %83 = vperm.xlu0 %82, %v62
    %v84 = vpop.permute.xlu0 %83
    %85 = vset.pattern.permute.xlu0 0
    %86 = vperm.xlu0 %85, %v63
    %v87 = vpop.permute.xlu0 %86
    %88 = vset.pattern.permute.xlu0 0
    %89 = vperm.xlu0 %88, %v64
    %v90 = vpop.permute.xlu0 %89
    %vm91 = vcmp.eq.s32.totalorder %v66, %v69
    %vm92 = vcmp.eq.s32.totalorder %v66, %v72
    %vm93 = vcmp.eq.s32.totalorder %v66, %v75
    %vm94 = vcmp.eq.s32.totalorder %v66, %v78
    %vm95 = vcmp.eq.s32.totalorder %v66, %v81
    %vm96 = vcmp.eq.s32.totalorder %v66, %v84
    %vm97 = vcmp.eq.s32.totalorder %v66, %v87
    %vm98 = vcmp.eq.s32.totalorder %v66, %v90
    %vm99 = vcmp.eq.s32.totalorder %v66, 50
    %vm100 = vmor %vm91, %vm99
    %vm101 = vmor %vm92, %vm99
    %vm102 = vmor %vm93, %vm99
    %vm103 = vmor %vm94, %vm99
    %vm104 = vmor %vm95, %vm99
    %vm105 = vmor %vm96, %vm99
    %vm106 = vmor %vm97, %vm99
    %vm107 = vmor %vm98, %vm99
    %v108 = vsel %vm100, 1, 0
    %v109 = vsel %vm101, 1, 0
    %v110 = vsel %vm102, 1, 0
    %v111 = vsel %vm103, 1, 0
    %v112 = vsel %vm104, 1, 0
    %v113 = vsel %vm105, 1, 0
    %v114 = vsel %vm106, 1, 0
    %v115 = vsel %vm107, 1, 0
    %v116 = vcvt.s32.f32 %v108
    %v117 = vcvt.s32.f32 %v109
    %v118 = vcvt.s32.f32 %v110
    %v119 = vcvt.s32.f32 %v111
    %v120 = vcvt.s32.f32 %v112
    %v121 = vcvt.s32.f32 %v113
    %v122 = vcvt.s32.f32 %v114
    %v123 = vcvt.s32.f32 %v115
    %v124 = vld [vmem:[#allocation2] sm:$0xff]
    %v125 = vld [vmem:[#allocation2 + $0x8] sm:$0xff]
    %v126 = vld [vmem:[#allocation2 + $0x10] sm:$0xff]
    %v127 = vld [vmem:[#allocation2 + $0x18] sm:$0xff]
    %v128 = vld [vmem:[#allocation2 + $0x20] sm:$0xff]
    %v129 = vld [vmem:[#allocation2 + $0x28] sm:$0xff]
    %v130 = vld [vmem:[#allocation2 + $0x30] sm:$0xff]
    %v131 = vld [vmem:[#allocation2 + $0x38] sm:$0xff]
    %v132 = vld [vmem:[#allocation2 + $0x40] sm:$0xff]
    %v133 = vld [vmem:[#allocation2 + $0x48] sm:$0xff]
    %v134 = vld [vmem:[#allocation2 + $0x50] sm:$0xff]
    %v135 = vld [vmem:[#allocation2 + $0x58] sm:$0xff]
    %v136 = vld [vmem:[#allocation2 + $0x60] sm:$0xff]
    %v137 = vld [vmem:[#allocation2 + $0x68] sm:$0xff]
    %v138 = vld [vmem:[#allocation2 + $0x70] sm:$0xff]
    %v139 = vld [vmem:[#allocation2 + $0x78] sm:$0xff]
    %v140 = vld [vmem:[#allocation2 + $0x80] sm:$0xff]
    %v141 = vld [vmem:[#allocation2 + $0x88] sm:$0xff]
    %v142 = vld [vmem:[#allocation2 + $0x90] sm:$0xff]
    %v143 = vld [vmem:[#allocation2 + $0x98] sm:$0xff]
    %v144 = vld [vmem:[#allocation2 + $0xa0] sm:$0xff]
    %v145 = vld [vmem:[#allocation2 + $0xa8] sm:$0xff]
    %v146 = vld [vmem:[#allocation2 + $0xb0] sm:$0xff]
    %v147 = vld [vmem:[#allocation2 + $0xb8] sm:$0xff]
    %v148 = vld [vmem:[#allocation2 + $0xc0] sm:$0x7]
    %v149 = vld [vmem:[#allocation2 + $0xc8] sm:$0x7]
    %v150 = vld [vmem:[#allocation2 + $0xd0] sm:$0x7]
    %v151 = vld [vmem:[#allocation2 + $0xd8] sm:$0x7]
    %vm152 = vcmask 416768
    %v154 = vsel %vm152, %v116, 0
    %v157 = vsel %vm152, %v117, 0
    %v160 = vsel %vm152, %v118, 0
    %v163 = vsel %vm152, %v119, 0
    %v166 = vsel %vm152, %v120, 0
    %v169 = vsel %vm152, %v121, 0
    %v172 = vsel %vm152, %v122, 0
    %v175 = vsel %vm152, %v123, 0
    %vm177 = vcmask 1042432
    %v179 = vsel %vm177, %v148, 0
    %v182 = vsel %vm177, %v149, 0
    %v185 = vsel %vm177, %v150, 0
    %v188 = vsel %vm177, %v151, 0
    %190 = vmatprep.subr.mxu0 0.0
    %191 = vmatpush1.msra.mxu0 0.0
    %192 = vmatprep.subr.mxu0 0.0
    %193 = vmatpush1.msra.mxu0 0.0
    %194 = vmatprep.subr.mxu0 0.0
    %195 = vmatpush1.msra.mxu0 0.0
    %196 = vmatprep.subr.mxu0 0.0
    %197 = vmatpush1.msra.mxu0 0.0
    %198 = vmatprep.subr.mxu0 0.0
    %199 = vmatpush1.msra.mxu0 0.0
    %200 = vmatprep.subr.mxu0 0.0
    %201 = vmatpush1.msra.mxu0 0.0
    %202 = vmatprep.subr.mxu0 0.0
    %203 = vmatpush1.msra.mxu0 0.0
    %204 = vmatprep.subr.mxu0 0.0
    %205 = vmatpush1.msra.mxu0 0.0
    %206 = vmatprep.subr.mxu0 0.0
    %207 = vmatpush1.msra.mxu0 0.0
    %208 = vmatprep.subr.mxu0 %v182
    %209 = vmatpush1.msra.mxu0 %v179
    %210 = vmatprep.subr.mxu0 %v145
    %211 = vmatpush1.msra.mxu0 %v144
    %212 = vmatprep.subr.mxu0 %v141
    %213 = vmatpush1.msra.mxu0 %v140
    %214 = vmatprep.subr.mxu0 %v137
    %215 = vmatpush1.msra.mxu0 %v136
    %216 = vmatprep.subr.mxu0 %v133
    %217 = vmatpush1.msra.mxu0 %v132
    %218 = vmatprep.subr.mxu0 %v129
    %219 = vmatpush1.msra.mxu0 %v128
    %220 = vmatprep.subr.mxu0 %v125
    %221 = vmatpush1.msra.mxu0 %v124
    %222 = vmatprep.subr.mxu0 0.0
    %223 = vmatpush2.msra.mxu0 0.0
    %224 = vmatprep.subr.mxu0 0.0
    %225 = vmatpush2.msra.mxu0 0.0
    %226 = vmatprep.subr.mxu0 0.0
    %227 = vmatpush2.msra.mxu0 0.0
    %228 = vmatprep.subr.mxu0 0.0
    %229 = vmatpush2.msra.mxu0 0.0
    %230 = vmatprep.subr.mxu0 0.0
    %231 = vmatpush2.msra.mxu0 0.0
    %232 = vmatprep.subr.mxu0 0.0
    %233 = vmatpush2.msra.mxu0 0.0
    %234 = vmatprep.subr.mxu0 0.0
    %235 = vmatpush2.msra.mxu0 0.0
    %236 = vmatprep.subr.mxu0 0.0
    %237 = vmatpush2.msra.mxu0 0.0
    %238 = vmatprep.subr.mxu0 0.0
    %239 = vmatpush2.msra.mxu0 0.0
    %240 = vmatprep.subr.mxu0 0.0
    %241 = vmatpush2.msra.mxu0 0.0
    %242 = vmatprep.subr.mxu0 0.0
    %243 = vmatpush2.msra.mxu0 0.0
    %244 = vmatprep.subr.mxu0 0.0
    %245 = vmatpush2.msra.mxu0 0.0
    %246 = vmatprep.subr.mxu0 0.0
    %247 = vmatpush2.msra.mxu0 0.0
    %248 = vmatprep.subr.mxu0 0.0
    %249 = vmatpush2.msra.mxu0 0.0
    %250 = vmatprep.subr.mxu0 0.0
    %251 = vmatpush2.msra.mxu0 0.0
    %252 = vmatprep.subr.mxu0 0.0
    %253 = vmatpush2.msra.mxu0 0.0
    %254 = vmatprep.mubr.f32.mxu0 0.0
    %255 = vmatmul.mubr.f32.gmra.mxu0 %v154
    %v256 = vpop.f32.mrf.mxu0
    %v257 = vadd.f32 0.0, %v256
    %v258 = vpop.f32.mrf.mxu0
    %259 = vmatprep.mubr.f32.mxu0 0.0
    %260 = vmatmul.mubr.f32.gmra.mxu0 %v157
    %v261 = vpop.f32.mrf.mxu0
    %v262 = vadd.f32 0.0, %v261
    %v263 = vpop.f32.mrf.mxu0
    %v264 = vadd.f32 0.0, %v263
    %265 = vmatprep.mubr.f32.mxu0 0.0
    %266 = vmatmul.mubr.f32.gmra.mxu0 %v160
    %v267 = vpop.f32.mrf.mxu0
    %v268 = vadd.f32 0.0, %v267
    %v269 = vpop.f32.mrf.mxu0
    %v270 = vadd.f32 0.0, %v269
    %271 = vmatprep.mubr.f32.mxu0 0.0
    %272 = vmatmul.mubr.f32.gmra.mxu0 %v163
    %v273 = vpop.f32.mrf.mxu0
    %v274 = vadd.f32 0.0, %v273
    %v275 = vpop.f32.mrf.mxu0
    %v276 = vadd.f32 0.0, %v275
    %277 = vmatprep.mubr.f32.mxu0 0.0
    %278 = vmatmul.mubr.f32.gmra.mxu0 %v166
    %v279 = vpop.f32.mrf.mxu0
    %v280 = vadd.f32 0.0, %v279
    %v281 = vpop.f32.mrf.mxu0
    %v282 = vadd.f32 0.0, %v281
    %283 = vmatprep.mubr.f32.mxu0 0.0
    %284 = vmatmul.mubr.f32.gmra.mxu0 %v169
    %v285 = vpop.f32.mrf.mxu0
    %v286 = vadd.f32 0.0, %v285
    %v287 = vpop.f32.mrf.mxu0
    %v288 = vadd.f32 0.0, %v287
    %289 = vmatprep.mubr.f32.mxu0 0.0
    %290 = vmatmul.mubr.f32.gmra.mxu0 %v172
    %v291 = vpop.f32.mrf.mxu0
    %v292 = vadd.f32 0.0, %v291
    %v293 = vpop.f32.mrf.mxu0
    %v294 = vadd.f32 0.0, %v293
    %295 = vmatprep.mubr.f32.mxu0 0.0
    %296 = vmatmul.mubr.f32.gmra.mxu0 %v175
    %v297 = vpop.f32.mrf.mxu0
    %v298 = vadd.f32 0.0, %v297
    %v299 = vpop.f32.mrf.mxu0
    %v300 = vadd.f32 0.0, %v299
    %301 = vdwg.mxu0
    %302 = vmatprep.subr.mxu0 0.0
    %303 = vmatpush1.msra.mxu0 0.0
    %304 = vmatprep.subr.mxu0 0.0
    %305 = vmatpush1.msra.mxu0 0.0
    %306 = vmatprep.subr.mxu0 0.0
    %307 = vmatpush1.msra.mxu0 0.0
    %308 = vmatprep.subr.mxu0 0.0
    %309 = vmatpush1.msra.mxu0 0.0
    %310 = vmatprep.subr.mxu0 0.0
    %311 = vmatpush1.msra.mxu0 0.0
    %312 = vmatprep.subr.mxu0 0.0
    %313 = vmatpush1.msra.mxu0 0.0
    %314 = vmatprep.subr.mxu0 0.0
    %315 = vmatpush1.msra.mxu0 0.0
    %316 = vmatprep.subr.mxu0 0.0
    %317 = vmatpush1.msra.mxu0 0.0
    %318 = vmatprep.subr.mxu0 0.0
    %319 = vmatpush1.msra.mxu0 0.0
    %320 = vmatprep.subr.mxu0 %v188
    %321 = vmatpush1.msra.mxu0 %v185
    %322 = vmatprep.subr.mxu0 %v147
    %323 = vmatpush1.msra.mxu0 %v146
    %324 = vmatprep.subr.mxu0 %v143
    %325 = vmatpush1.msra.mxu0 %v142
    %326 = vmatprep.subr.mxu0 %v139
    %327 = vmatpush1.msra.mxu0 %v138
    %328 = vmatprep.subr.mxu0 %v135
    %329 = vmatpush1.msra.mxu0 %v134
    %330 = vmatprep.subr.mxu0 %v131
    %331 = vmatpush1.msra.mxu0 %v130
    %332 = vmatprep.subr.mxu0 %v127
    %333 = vmatpush1.msra.mxu0 %v126
    %334 = vmatprep.subr.mxu0 0.0
    %335 = vmatpush2.msra.mxu0 0.0
    %336 = vmatprep.subr.mxu0 0.0
    %337 = vmatpush2.msra.mxu0 0.0
    %338 = vmatprep.subr.mxu0 0.0
    %339 = vmatpush2.msra.mxu0 0.0
    %340 = vmatprep.subr.mxu0 0.0
    %341 = vmatpush2.msra.mxu0 0.0
    %342 = vmatprep.subr.mxu0 0.0
    %343 = vmatpush2.msra.mxu0 0.0
    %344 = vmatprep.subr.mxu0 0.0
    %345 = vmatpush2.msra.mxu0 0.0
    %346 = vmatprep.subr.mxu0 0.0
    %347 = vmatpush2.msra.mxu0 0.0
    %348 = vmatprep.subr.mxu0 0.0
    %349 = vmatpush2.msra.mxu0 0.0
    %350 = vmatprep.subr.mxu0 0.0
    %351 = vmatpush2.msra.mxu0 0.0
    %352 = vmatprep.subr.mxu0 0.0
    %353 = vmatpush2.msra.mxu0 0.0
    %354 = vmatprep.subr.mxu0 0.0
    %355 = vmatpush2.msra.mxu0 0.0
    %356 = vmatprep.subr.mxu0 0.0
    %357 = vmatpush2.msra.mxu0 0.0
    %358 = vmatprep.subr.mxu0 0.0
    %359 = vmatpush2.msra.mxu0 0.0
    %360 = vmatprep.subr.mxu0 0.0
    %361 = vmatpush2.msra.mxu0 0.0
    %362 = vmatprep.subr.mxu0 0.0
    %363 = vmatpush2.msra.mxu0 0.0
    %364 = vmatprep.subr.mxu0 0.0
    %365 = vmatpush2.msra.mxu0 0.0
    %366 = vmatprep.mubr.f32.mxu0 0.0
    %367 = vmatmul.mubr.f32.gmra.mxu0 %v154
    %v368 = vpop.f32.mrf.mxu0
    %v369 = vadd.f32 0.0, %v368
    %v370 = vpop.f32.mrf.mxu0
    %v371 = vadd.f32 0.0, %v370
    %372 = vmatprep.mubr.f32.mxu0 0.0
    %373 = vmatmul.mubr.f32.gmra.mxu0 %v157
    %v374 = vpop.f32.mrf.mxu0
    %v375 = vadd.f32 0.0, %v374
    %v376 = vpop.f32.mrf.mxu0
    %v377 = vadd.f32 0.0, %v376
    %378 = vmatprep.mubr.f32.mxu0 0.0
    %379 = vmatmul.mubr.f32.gmra.mxu0 %v160
    %v380 = vpop.f32.mrf.mxu0
    %v381 = vadd.f32 0.0, %v380
    %v382 = vpop.f32.mrf.mxu0
    %v383 = vadd.f32 0.0, %v382
    %384 = vmatprep.mubr.f32.mxu0 0.0
    %385 = vmatmul.mubr.f32.gmra.mxu0 %v163
    %v386 = vpop.f32.mrf.mxu0
    %v387 = vadd.f32 0.0, %v386
    %v388 = vpop.f32.mrf.mxu0
    %v389 = vadd.f32 0.0, %v388
    %390 = vmatprep.mubr.f32.mxu0 0.0
    %391 = vmatmul.mubr.f32.gmra.mxu0 %v166
    %v392 = vpop.f32.mrf.mxu0
    %v393 = vadd.f32 0.0, %v392
    %v394 = vpop.f32.mrf.mxu0
    %v395 = vadd.f32 0.0, %v394
    %396 = vmatprep.mubr.f32.mxu0 0.0
    %397 = vmatmul.mubr.f32.gmra.mxu0 %v169
    %v398 = vpop.f32.mrf.mxu0
    %v399 = vadd.f32 0.0, %v398
    %v400 = vpop.f32.mrf.mxu0
    %v401 = vadd.f32 0.0, %v400
    %402 = vmatprep.mubr.f32.mxu0 0.0
    %403 = vmatmul.mubr.f32.gmra.mxu0 %v172
    %v404 = vpop.f32.mrf.mxu0
    %v405 = vadd.f32 0.0, %v404
    %v406 = vpop.f32.mrf.mxu0
    %v407 = vadd.f32 0.0, %v406
    %408 = vmatprep.mubr.f32.mxu0 0.0
    %409 = vmatmul.mubr.f32.gmra.mxu0 %v175
    %v410 = vpop.f32.mrf.mxu0
    %v411 = vadd.f32 0.0, %v410
    %v412 = vpop.f32.mrf.mxu0
    %v413 = vadd.f32 0.0, %v412
    %414 = vdwg.mxu0
    %v415 = vld [vmem:[#allocation4] sm:$0xff]
    %v416 = vld [vmem:[#allocation4 + $0x8] sm:$0xff]
    %v417 = vld [vmem:[#allocation4 + $0x10] sm:$0xff]
    %v418 = vld [vmem:[#allocation4 + $0x18] sm:$0xff]
    %v419 = vld [vmem:[#allocation4 + $0x20] sm:$0xff]
    %v420 = vld [vmem:[#allocation4 + $0x28] sm:$0xff]
    %v421 = vld [vmem:[#allocation4 + $0x30] sm:$0xff]
    %v422 = vld [vmem:[#allocation4 + $0x38] sm:$0xff]
    %v423 = vld [vmem:[#allocation4 + $0x40] sm:$0xff]
    %v424 = vld [vmem:[#allocation4 + $0x48] sm:$0xff]
    %v425 = vld [vmem:[#allocation4 + $0x50] sm:$0xff]
    %v426 = vld [vmem:[#allocation4 + $0x58] sm:$0xff]
    %v427 = vld [vmem:[#allocation4 + $0x60] sm:$0xff]
    %v428 = vld [vmem:[#allocation4 + $0x68] sm:$0xff]
    %v429 = vld [vmem:[#allocation4 + $0x70] sm:$0xff]
    %v430 = vld [vmem:[#allocation4 + $0x78] sm:$0xff]
    %v431 = vld [vmem:[#allocation4 + $0x80] sm:$0xff]
    %v432 = vld [vmem:[#allocation4 + $0x88] sm:$0xff]
    %v433 = vld [vmem:[#allocation4 + $0x90] sm:$0xff]
    %v434 = vld [vmem:[#allocation4 + $0x98] sm:$0xff]
    %v435 = vld [vmem:[#allocation4 + $0xa0] sm:$0xff]
    %v436 = vld [vmem:[#allocation4 + $0xa8] sm:$0xff]
    %v437 = vld [vmem:[#allocation4 + $0xb0] sm:$0xff]
    %v438 = vld [vmem:[#allocation4 + $0xb8] sm:$0xff]
    %v439 = vld [vmem:[#allocation4 + $0xc0] sm:$0xff]
    %v440 = vld [vmem:[#allocation4 + $0xc8] sm:$0xff]
    %v441 = vld [vmem:[#allocation4 + $0xd0] sm:$0xff]
    %v442 = vld [vmem:[#allocation4 + $0xd8] sm:$0xff]
    %v443 = vld [vmem:[#allocation4 + $0xe0] sm:$0xff]
    %v444 = vld [vmem:[#allocation4 + $0xe8] sm:$0xff]
    %v445 = vld [vmem:[#allocation4 + $0xf0] sm:$0xff]
    %v446 = vld [vmem:[#allocation4 + $0xf8] sm:$0xff]
    %v447 = vld [vmem:[#allocation4 + $0x100] sm:$0xff]
    %v448 = vld [vmem:[#allocation4 + $0x108] sm:$0xff]
    %v449 = vld [vmem:[#allocation4 + $0x110] sm:$0xff]
    %v450 = vld [vmem:[#allocation4 + $0x118] sm:$0xff]
    %v451 = vld [vmem:[#allocation4 + $0x120] sm:$0xff]
    %v452 = vld [vmem:[#allocation4 + $0x128] sm:$0xff]
    %v453 = vld [vmem:[#allocation4 + $0x130] sm:$0xff]
    %v454 = vld [vmem:[#allocation4 + $0x138] sm:$0xff]
    %v455 = vld [vmem:[#allocation4 + $0x140] sm:$0xff]
    %v456 = vld [vmem:[#allocation4 + $0x148] sm:$0xff]
    %v457 = vld [vmem:[#allocation4 + $0x150] sm:$0xff]
    %v458 = vld [vmem:[#allocation4 + $0x158] sm:$0xff]
    %v459 = vld [vmem:[#allocation4 + $0x160] sm:$0xff]
    %v460 = vld [vmem:[#allocation4 + $0x168] sm:$0xff]
    %v461 = vld [vmem:[#allocation4 + $0x170] sm:$0xff]
    %v462 = vld [vmem:[#allocation4 + $0x178] sm:$0xff]
    %v463 = vld [vmem:[#allocation4 + $0x180] sm:$0xff]
    %v464 = vld [vmem:[#allocation4 + $0x188] sm:$0xff]
    %v465 = vld [vmem:[#allocation4 + $0x190] sm:$0xff]
    %v466 = vld [vmem:[#allocation4 + $0x198] sm:$0xff]
    %v467 = vld [vmem:[#allocation4 + $0x1a0] sm:$0xff]
    %v468 = vld [vmem:[#allocation4 + $0x1a8] sm:$0xff]
    %v469 = vld [vmem:[#allocation4 + $0x1b0] sm:$0xff]
    %v470 = vld [vmem:[#allocation4 + $0x1b8] sm:$0xff]
    %v471 = vld [vmem:[#allocation4 + $0x1c0] sm:$0xff]
    %v472 = vld [vmem:[#allocation4 + $0x1c8] sm:$0xff]
    %v473 = vld [vmem:[#allocation4 + $0x1d0] sm:$0xff]
    %v474 = vld [vmem:[#allocation4 + $0x1d8] sm:$0xff]
    %v475 = vld [vmem:[#allocation4 + $0x1e0] sm:$0xff]
    %v476 = vld [vmem:[#allocation4 + $0x1e8] sm:$0xff]
    %v477 = vld [vmem:[#allocation4 + $0x1f0] sm:$0xff]
    %v478 = vld [vmem:[#allocation4 + $0x1f8] sm:$0xff]
    %v479 = vmul.f32 %v257, 0.5
    %v480 = vtanh.pop %v479
    %v481 = vmul.f32 %v480, 0.5
    %v482 = vadd.f32 %v481, 0.5
    %v483 = vtanh.pop %v369
    %v484 = vmul.f32 %v482, %v483
    %v485 = vmul.f32 %v371, 0.5
    %v486 = vtanh.pop %v485
    %v487 = vmul.f32 %v486, 0.5
    %v488 = vadd.f32 %v487, 0.5
    %v489 = vtanh.pop %v484
    %v490 = vmul.f32 %v488, %v489
    %491 = vmatprep.subr.mxu0 %v476
    %492 = vmatpush1.msra.mxu0 %v475
    %493 = vmatprep.subr.mxu0 %v472
    %494 = vmatpush1.msra.mxu0 %v471
    %495 = vmatprep.subr.mxu0 %v468
    %496 = vmatpush1.msra.mxu0 %v467
    %497 = vmatprep.subr.mxu0 %v464
    %498 = vmatpush1.msra.mxu0 %v463
    %499 = vmatprep.subr.mxu0 %v460
    %500 = vmatpush1.msra.mxu0 %v459
    %501 = vmatprep.subr.mxu0 %v456
    %502 = vmatpush1.msra.mxu0 %v455
    %503 = vmatprep.subr.mxu0 %v452
    %504 = vmatpush1.msra.mxu0 %v451
    %505 = vmatprep.subr.mxu0 %v448
    %506 = vmatpush1.msra.mxu0 %v447
    %507 = vmatprep.subr.mxu0 %v444
    %508 = vmatpush1.msra.mxu0 %v443
    %509 = vmatprep.subr.mxu0 %v440
    %510 = vmatpush1.msra.mxu0 %v439
    %511 = vmatprep.subr.mxu0 %v436
    %512 = vmatpush1.msra.mxu0 %v435
    %513 = vmatprep.subr.mxu0 %v432
    %514 = vmatpush1.msra.mxu0 %v431
    %515 = vmatprep.subr.mxu0 %v428
    %516 = vmatpush1.msra.mxu0 %v427
    %517 = vmatprep.subr.mxu0 %v424
    %518 = vmatpush1.msra.mxu0 %v423
    %519 = vmatprep.subr.mxu0 %v420
    %520 = vmatpush1.msra.mxu0 %v419
    %521 = vmatprep.subr.mxu0 %v416
    %522 = vmatpush1.msra.mxu0 %v415
    %523 = vmatprep.subr.mxu0 0.0
    %524 = vmatpush2.msra.mxu0 0.0
    %525 = vmatprep.subr.mxu0 0.0
    %526 = vmatpush2.msra.mxu0 0.0
    %527 = vmatprep.subr.mxu0 0.0
    %528 = vmatpush2.msra.mxu0 0.0
    %529 = vmatprep.subr.mxu0 0.0
    %530 = vmatpush2.msra.mxu0 0.0
    %531 = vmatprep.subr.mxu0 0.0
    %532 = vmatpush2.msra.mxu0 0.0
    %533 = vmatprep.subr.mxu0 0.0
    %534 = vmatpush2.msra.mxu0 0.0
    %535 = vmatprep.subr.mxu0 0.0
    %536 = vmatpush2.msra.mxu0 0.0
    %537 = vmatprep.subr.mxu0 0.0
    %538 = vmatpush2.msra.mxu0 0.0
    %539 = vmatprep.subr.mxu0 0.0
    %540 = vmatpush2.msra.mxu0 0.0
    %541 = vmatprep.subr.mxu0 0.0
    %542 = vmatpush2.msra.mxu0 0.0
    %543 = vmatprep.subr.mxu0 0.0
    %544 = vmatpush2.msra.mxu0 0.0
    %545 = vmatprep.subr.mxu0 0.0
    %546 = vmatpush2.msra.mxu0 0.0
    %547 = vmatprep.subr.mxu0 0.0
    %548 = vmatpush2.msra.mxu0 0.0
    %549 = vmatprep.subr.mxu0 0.0
    %550 = vmatpush2.msra.mxu0 0.0
    %551 = vmatprep.subr.mxu0 0.0
    %552 = vmatpush2.msra.mxu0 0.0
    %553 = vmatprep.subr.mxu0 0.0
    %554 = vmatpush2.msra.mxu0 0.0
    %555 = vmatprep.mubr.f32.mxu0 0.0
    %556 = vmatmul.mubr.f32.gmra.mxu0 %v490
    %v557 = vpop.f32.mrf.mxu0
    %v558 = vadd.f32 0.0, %v557
    %v559 = vpop.f32.mrf.mxu0
    %v560 = vadd.f32 0.0, %v559
    %561 = vdwg.mxu0
    %562 = vmatprep.subr.mxu0 %v478
    %563 = vmatpush1.msra.mxu0 %v477
    %564 = vmatprep.subr.mxu0 %v474
    %565 = vmatpush1.msra.mxu0 %v473
    %566 = vmatprep.subr.mxu0 %v470
    %567 = vmatpush1.msra.mxu0 %v469
    %568 = vmatprep.subr.mxu0 %v466
    %569 = vmatpush1.msra.mxu0 %v465
    %570 = vmatprep.subr.mxu0 %v462
    %571 = vmatpush1.msra.mxu0 %v461
    %572 = vmatprep.subr.mxu0 %v458
    %573 = vmatpush1.msra.mxu0 %v457
    %574 = vmatprep.subr.mxu0 %v454
    %575 = vmatpush1.msra.mxu0 %v453
    %576 = vmatprep.subr.mxu0 %v450
    %577 = vmatpush1.msra.mxu0 %v449
    %578 = vmatprep.subr.mxu0 %v446
    %579 = vmatpush1.msra.mxu0 %v445
    %580 = vmatprep.subr.mxu0 %v442
    %581 = vmatpush1.msra.mxu0 %v441
    %582 = vmatprep.subr.mxu0 %v438
    %583 = vmatpush1.msra.mxu0 %v437
    %584 = vmatprep.subr.mxu0 %v434
    %585 = vmatpush1.msra.mxu0 %v433
    %586 = vmatprep.subr.mxu0 %v430
    %587 = vmatpush1.msra.mxu0 %v429
    %588 = vmatprep.subr.mxu0 %v426
    %589 = vmatpush1.msra.mxu0 %v425
    %590 = vmatprep.subr.mxu0 %v422
    %591 = vmatpush1.msra.mxu0 %v421
    %592 = vmatprep.subr.mxu0 %v418
    %593 = vmatpush1.msra.mxu0 %v417
    %594 = vmatprep.subr.mxu0 0.0
    %595 = vmatpush2.msra.mxu0 0.0
    %596 = vmatprep.subr.mxu0 0.0
    %597 = vmatpush2.msra.mxu0 0.0
    %598 = vmatprep.subr.mxu0 0.0
    %599 = vmatpush2.msra.mxu0 0.0
    %600 = vmatprep.subr.mxu0 0.0
    %601 = vmatpush2.msra.mxu0 0.0
    %602 = vmatprep.subr.mxu0 0.0
    %603 = vmatpush2.msra.mxu0 0.0
    %604 = vmatprep.subr.mxu0 0.0
    %605 = vmatpush2.msra.mxu0 0.0
    %606 = vmatprep.subr.mxu0 0.0
    %607 = vmatpush2.msra.mxu0 0.0
    %608 = vmatprep.subr.mxu0 0.0
    %609 = vmatpush2.msra.mxu0 0.0
    %610 = vmatprep.subr.mxu0 0.0
    %611 = vmatpush2.msra.mxu0 0.0
    %612 = vmatprep.subr.mxu0 0.0
    %613 = vmatpush2.msra.mxu0 0.0
    %614 = vmatprep.subr.mxu0 0.0
    %615 = vmatpush2.msra.mxu0 0.0
    %616 = vmatprep.subr.mxu0 0.0
    %617 = vmatpush2.msra.mxu0 0.0
    %618 = vmatprep.subr.mxu0 0.0
    %619 = vmatpush2.msra.mxu0 0.0
    %620 = vmatprep.subr.mxu0 0.0
    %621 = vmatpush2.msra.mxu0 0.0
    %622 = vmatprep.subr.mxu0 0.0
    %623 = vmatpush2.msra.mxu0 0.0
    %624 = vmatprep.subr.mxu0 0.0
    %625 = vmatpush2.msra.mxu0 0.0
    %626 = vmatprep.mubr.f32.mxu0 0.0
    %627 = vmatmul.mubr.f32.gmra.mxu0 %v490
    %v628 = vpop.f32.mrf.mxu0
    %v629 = vadd.f32 0.0, %v628
    %v630 = vpop.f32.mrf.mxu0
    %v631 = vadd.f32 0.0, %v630
    %632 = vdwg.mxu0
    %v633 = vadd.f32 %v262, %v558
    %v634 = vadd.f32 %v264, %v560
    %v635 = vadd.f32 %v375, %v629
    %v636 = vadd.f32 %v377, %v631
    %v637 = vmul.f32 %v633, 0.5
    %v638 = vtanh.pop %v637
    %v639 = vmul.f32 %v638, 0.5
    %v640 = vadd.f32 %v639, 0.5
    %v641 = vmul.f32 %v634, 0.5
    %v642 = vtanh.pop %v641
    %v643 = vmul.f32 %v642, 0.5
    %v644 = vadd.f32 %v643, 0.5
    %v645 = vtanh.pop %v635
    %v646 = vmul.f32 %v636, 0.5
    %v647 = vtanh.pop %v646
    %v648 = vmul.f32 %v647, 0.5
    %v649 = vadd.f32 %v648, 0.5
    %v650 = vmul.f32 %v644, %v484
    %v651 = vmul.f32 %v640, %v645
    %v652 = vadd.f32 %v650, %v651
    %v653 = vtanh.pop %v652
    %v654 = vmul.f32 %v649, %v653
    %655 = vmatprep.subr.mxu0 %v476
    %656 = vmatpush1.msra.mxu0 %v475
    %657 = vmatprep.subr.mxu0 %v472
    %658 = vmatpush1.msra.mxu0 %v471
    %659 = vmatprep.subr.mxu0 %v468
    %660 = vmatpush1.msra.mxu0 %v467
    %661 = vmatprep.subr.mxu0 %v464
    %662 = vmatpush1.msra.mxu0 %v463
    %663 = vmatprep.subr.mxu0 %v460
    %664 = vmatpush1.msra.mxu0 %v459
    %665 = vmatprep.subr.mxu0 %v456
    %666 = vmatpush1.msra.mxu0 %v455
    %667 = vmatprep.subr.mxu0 %v452
    %668 = vmatpush1.msra.mxu0 %v451
    %669 = vmatprep.subr.mxu0 %v448
    %670 = vmatpush1.msra.mxu0 %v447
    %671 = vmatprep.subr.mxu0 %v444
    %672 = vmatpush1.msra.mxu0 %v443
    %673 = vmatprep.subr.mxu0 %v440
    %674 = vmatpush1.msra.mxu0 %v439
    %675 = vmatprep.subr.mxu0 %v436
    %676 = vmatpush1.msra.mxu0 %v435
    %677 = vmatprep.subr.mxu0 %v432
    %678 = vmatpush1.msra.mxu0 %v431
    %679 = vmatprep.subr.mxu0 %v428
    %680 = vmatpush1.msra.mxu0 %v427
    %681 = vmatprep.subr.mxu0 %v424
    %682 = vmatpush1.msra.mxu0 %v423
    %683 = vmatprep.subr.mxu0 %v420
    %684 = vmatpush1.msra.mxu0 %v419
    %685 = vmatprep.subr.mxu0 %v416
    %686 = vmatpush1.msra.mxu0 %v415
    %687 = vmatprep.subr.mxu0 0.0
    %688 = vmatpush2.msra.mxu0 0.0
    %689 = vmatprep.subr.mxu0 0.0
    %690 = vmatpush2.msra.mxu0 0.0
    %691 = vmatprep.subr.mxu0 0.0
    %692 = vmatpush2.msra.mxu0 0.0
    %693 = vmatprep.subr.mxu0 0.0
    %694 = vmatpush2.msra.mxu0 0.0
    %695 = vmatprep.subr.mxu0 0.0
    %696 = vmatpush2.msra.mxu0 0.0
    %697 = vmatprep.subr.mxu0 0.0
    %698 = vmatpush2.msra.mxu0 0.0
    %699 = vmatprep.subr.mxu0 0.0
    %700 = vmatpush2.msra.mxu0 0.0
    %701 = vmatprep.subr.mxu0 0.0
    %702 = vmatpush2.msra.mxu0 0.0
    %703 = vmatprep.subr.mxu0 0.0
    %704 = vmatpush2.msra.mxu0 0.0
    %705 = vmatprep.subr.mxu0 0.0
    %706 = vmatpush2.msra.mxu0 0.0
    %707 = vmatprep.subr.mxu0 0.0
    %708 = vmatpush2.msra.mxu0 0.0
    %709 = vmatprep.subr.mxu0 0.0
    %710 = vmatpush2.msra.mxu0 0.0
    %711 = vmatprep.subr.mxu0 0.0
    %712 = vmatpush2.msra.mxu0 0.0
    %713 = vmatprep.subr.mxu0 0.0
    %714 = vmatpush2.msra.mxu0 0.0
    %715 = vmatprep.subr.mxu0 0.0
    %716 = vmatpush2.msra.mxu0 0.0
    %717 = vmatprep.subr.mxu0 0.0
    %718 = vmatpush2.msra.mxu0 0.0
    %719 = vmatprep.mubr.f32.mxu0 0.0
    %720 = vmatmul.mubr.f32.gmra.mxu0 %v654
    %v721 = vpop.f32.mrf.mxu0
    %v722 = vadd.f32 0.0, %v721
    %v723 = vpop.f32.mrf.mxu0
    %v724 = vadd.f32 0.0, %v723
    %725 = vdwg.mxu0
    %726 = vmatprep.subr.mxu0 %v478
    %727 = vmatpush1.msra.mxu0 %v477
    %728 = vmatprep.subr.mxu0 %v474
    %729 = vmatpush1.msra.mxu0 %v473
    %730 = vmatprep.subr.mxu0 %v470
    %731 = vmatpush1.msra.mxu0 %v469
    %732 = vmatprep.subr.mxu0 %v466
    %733 = vmatpush1.msra.mxu0 %v465
    %734 = vmatprep.subr.mxu0 %v462
    %735 = vmatpush1.msra.mxu0 %v461
    %736 = vmatprep.subr.mxu0 %v458
    %737 = vmatpush1.msra.mxu0 %v457
    %738 = vmatprep.subr.mxu0 %v454
    %739 = vmatpush1.msra.mxu0 %v453
    %740 = vmatprep.subr.mxu0 %v450
    %741 = vmatpush1.msra.mxu0 %v449
    %742 = vmatprep.subr.mxu0 %v446
    %743 = vmatpush1.msra.mxu0 %v445
    %744 = vmatprep.subr.mxu0 %v442
    %745 = vmatpush1.msra.mxu0 %v441
    %746 = vmatprep.subr.mxu0 %v438
    %747 = vmatpush1.msra.mxu0 %v437
    %748 = vmatprep.subr.mxu0 %v434
    %749 = vmatpush1.msra.mxu0 %v433
    %750 = vmatprep.subr.mxu0 %v430
    %751 = vmatpush1.msra.mxu0 %v429
    %752 = vmatprep.subr.mxu0 %v426
    %753 = vmatpush1.msra.mxu0 %v425
    %754 = vmatprep.subr.mxu0 %v422
    %755 = vmatpush1.msra.mxu0 %v421
    %756 = vmatprep.subr.mxu0 %v418
    %757 = vmatpush1.msra.mxu0 %v417
    %758 = vmatprep.subr.mxu0 0.0
    %759 = vmatpush2.msra.mxu0 0.0
    %760 = vmatprep.subr.mxu0 0.0
    %761 = vmatpush2.msra.mxu0 0.0
    %762 = vmatprep.subr.mxu0 0.0
    %763 = vmatpush2.msra.mxu0 0.0
    %764 = vmatprep.subr.mxu0 0.0
    %765 = vmatpush2.msra.mxu0 0.0
    %766 = vmatprep.subr.mxu0 0.0
    %767 = vmatpush2.msra.mxu0 0.0
    %768 = vmatprep.subr.mxu0 0.0
    %769 = vmatpush2.msra.mxu0 0.0
    %770 = vmatprep.subr.mxu0 0.0
    %771 = vmatpush2.msra.mxu0 0.0
    %772 = vmatprep.subr.mxu0 0.0
    %773 = vmatpush2.msra.mxu0 0.0
    %774 = vmatprep.subr.mxu0 0.0
    %775 = vmatpush2.msra.mxu0 0.0
    %776 = vmatprep.subr.mxu0 0.0
    %777 = vmatpush2.msra.mxu0 0.0
    %778 = vmatprep.subr.mxu0 0.0
    %779 = vmatpush2.msra.mxu0 0.0
    %780 = vmatprep.subr.mxu0 0.0
    %781 = vmatpush2.msra.mxu0 0.0
    %782 = vmatprep.subr.mxu0 0.0
    %783 = vmatpush2.msra.mxu0 0.0
    %784 = vmatprep.subr.mxu0 0.0
    %785 = vmatpush2.msra.mxu0 0.0
    %786 = vmatprep.subr.mxu0 0.0
    %787 = vmatpush2.msra.mxu0 0.0
    %788 = vmatprep.subr.mxu0 0.0
    %789 = vmatpush2.msra.mxu0 0.0
    %790 = vmatprep.mubr.f32.mxu0 0.0
    %791 = vmatmul.mubr.f32.gmra.mxu0 %v654
    %v792 = vpop.f32.mrf.mxu0
    %v793 = vadd.f32 0.0, %v792
    %v794 = vpop.f32.mrf.mxu0
    %v795 = vadd.f32 0.0, %v794
    %796 = vdwg.mxu0
    %v797 = vadd.f32 %v268, %v722
    %v798 = vadd.f32 %v270, %v724
    %v799 = vadd.f32 %v381, %v793
    %v800 = vadd.f32 %v383, %v795
    %v801 = vmul.f32 %v797, 0.5
    %v802 = vtanh.pop %v801
    %v803 = vmul.f32 %v802, 0.5
    %v804 = vadd.f32 %v803, 0.5
    %v805 = vmul.f32 %v798, 0.5
    %v806 = vtanh.pop %v805
    %v807 = vmul.f32 %v806, 0.5
    %v808 = vadd.f32 %v807, 0.5
    %v809 = vtanh.pop %v799
    %v810 = vmul.f32 %v800, 0.5
    %v811 = vtanh.pop %v810
    %v812 = vmul.f32 %v811, 0.5
    %v813 = vadd.f32 %v812, 0.5
    %v814 = vmul.f32 %v808, %v652
    %v815 = vmul.f32 %v804, %v809
    %v816 = vadd.f32 %v814, %v815
    %v817 = vtanh.pop %v816
    %v818 = vmul.f32 %v813, %v817
    %819 = vmatprep.subr.mxu0 %v476
    %820 = vmatpush1.msra.mxu0 %v475
    %821 = vmatprep.subr.mxu0 %v472
    %822 = vmatpush1.msra.mxu0 %v471
    %823 = vmatprep.subr.mxu0 %v468
    %824 = vmatpush1.msra.mxu0 %v467
    %825 = vmatprep.subr.mxu0 %v464
    %826 = vmatpush1.msra.mxu0 %v463
    %827 = vmatprep.subr.mxu0 %v460
    %828 = vmatpush1.msra.mxu0 %v459
    %829 = vmatprep.subr.mxu0 %v456
    %830 = vmatpush1.msra.mxu0 %v455
    %831 = vmatprep.subr.mxu0 %v452
    %832 = vmatpush1.msra.mxu0 %v451
    %833 = vmatprep.subr.mxu0 %v448
    %834 = vmatpush1.msra.mxu0 %v447
    %835 = vmatprep.subr.mxu0 %v444
    %836 = vmatpush1.msra.mxu0 %v443
    %837 = vmatprep.subr.mxu0 %v440
    %838 = vmatpush1.msra.mxu0 %v439
    %839 = vmatprep.subr.mxu0 %v436
    %840 = vmatpush1.msra.mxu0 %v435
    %841 = vmatprep.subr.mxu0 %v432
    %842 = vmatpush1.msra.mxu0 %v431
    %843 = vmatprep.subr.mxu0 %v428
    %844 = vmatpush1.msra.mxu0 %v427
    %845 = vmatprep.subr.mxu0 %v424
    %846 = vmatpush1.msra.mxu0 %v423
    %847 = vmatprep.subr.mxu0 %v420
    %848 = vmatpush1.msra.mxu0 %v419
    %849 = vmatprep.subr.mxu0 %v416
    %850 = vmatpush1.msra.mxu0 %v415
    %851 = vmatprep.subr.mxu0 0.0
    %852 = vmatpush2.msra.mxu0 0.0
    %853 = vmatprep.subr.mxu0 0.0
    %854 = vmatpush2.msra.mxu0 0.0
    %855 = vmatprep.subr.mxu0 0.0
    %856 = vmatpush2.msra.mxu0 0.0
    %857 = vmatprep.subr.mxu0 0.0
    %858 = vmatpush2.msra.mxu0 0.0
    %859 = vmatprep.subr.mxu0 0.0
    %860 = vmatpush2.msra.mxu0 0.0
    %861 = vmatprep.subr.mxu0 0.0
    %862 = vmatpush2.msra.mxu0 0.0
    %863 = vmatprep.subr.mxu0 0.0
    %864 = vmatpush2.msra.mxu0 0.0
    %865 = vmatprep.subr.mxu0 0.0
    %866 = vmatpush2.msra.mxu0 0.0
    %867 = vmatprep.subr.mxu0 0.0
    %868 = vmatpush2.msra.mxu0 0.0
    %869 = vmatprep.subr.mxu0 0.0
    %870 = vmatpush2.msra.mxu0 0.0
    %871 = vmatprep.subr.mxu0 0.0
    %872 = vmatpush2.msra.mxu0 0.0
    %873 = vmatprep.subr.mxu0 0.0
    %874 = vmatpush2.msra.mxu0 0.0
    %875 = vmatprep.subr.mxu0 0.0
    %876 = vmatpush2.msra.mxu0 0.0
    %877 = vmatprep.subr.mxu0 0.0
    %878 = vmatpush2.msra.mxu0 0.0
    %879 = vmatprep.subr.mxu0 0.0
    %880 = vmatpush2.msra.mxu0 0.0
    %881 = vmatprep.subr.mxu0 0.0
    %882 = vmatpush2.msra.mxu0 0.0
    %883 = vmatprep.mubr.f32.mxu0 0.0
    %884 = vmatmul.mubr.f32.gmra.mxu0 %v818
    %v885 = vpop.f32.mrf.mxu0
    %v886 = vadd.f32 0.0, %v885
    %v887 = vpop.f32.mrf.mxu0
    %v888 = vadd.f32 0.0, %v887
    %889 = vdwg.mxu0
    %890 = vmatprep.subr.mxu0 %v478
    %891 = vmatpush1.msra.mxu0 %v477
    %892 = vmatprep.subr.mxu0 %v474
    %893 = vmatpush1.msra.mxu0 %v473
    %894 = vmatprep.subr.mxu0 %v470
    %895 = vmatpush1.msra.mxu0 %v469
    %896 = vmatprep.subr.mxu0 %v466
    %897 = vmatpush1.msra.mxu0 %v465
    %898 = vmatprep.subr.mxu0 %v462
    %899 = vmatpush1.msra.mxu0 %v461
    %900 = vmatprep.subr.mxu0 %v458
    %901 = vmatpush1.msra.mxu0 %v457
    %902 = vmatprep.subr.mxu0 %v454
    %903 = vmatpush1.msra.mxu0 %v453
    %904 = vmatprep.subr.mxu0 %v450
    %905 = vmatpush1.msra.mxu0 %v449
    %906 = vmatprep.subr.mxu0 %v446
    %907 = vmatpush1.msra.mxu0 %v445
    %908 = vmatprep.subr.mxu0 %v442
    %909 = vmatpush1.msra.mxu0 %v441
    %910 = vmatprep.subr.mxu0 %v438
    %911 = vmatpush1.msra.mxu0 %v437
    %912 = vmatprep.subr.mxu0 %v434
    %913 = vmatpush1.msra.mxu0 %v433
    %914 = vmatprep.subr.mxu0 %v430
    %915 = vmatpush1.msra.mxu0 %v429
    %916 = vmatprep.subr.mxu0 %v426
    %917 = vmatpush1.msra.mxu0 %v425
    %918 = vmatprep.subr.mxu0 %v422
    %919 = vmatpush1.msra.mxu0 %v421
    %920 = vmatprep.subr.mxu0 %v418
    %921 = vmatpush1.msra.mxu0 %v417
    %922 = vmatprep.subr.mxu0 0.0
    %923 = vmatpush2.msra.mxu0 0.0
    %924 = vmatprep.subr.mxu0 0.0
    %925 = vmatpush2.msra.mxu0 0.0
    %926 = vmatprep.subr.mxu0 0.0
    %927 = vmatpush2.msra.mxu0 0.0
    %928 = vmatprep.subr.mxu0 0.0
    %929 = vmatpush2.msra.mxu0 0.0
    %930 = vmatprep.subr.mxu0 0.0
    %931 = vmatpush2.msra.mxu0 0.0
    %932 = vmatprep.subr.mxu0 0.0
    %933 = vmatpush2.msra.mxu0 0.0
    %934 = vmatprep.subr.mxu0 0.0
    %935 = vmatpush2.msra.mxu0 0.0
    %936 = vmatprep.subr.mxu0 0.0
    %937 = vmatpush2.msra.mxu0 0.0
    %938 = vmatprep.subr.mxu0 0.0
    %939 = vmatpush2.msra.mxu0 0.0
    %940 = vmatprep.subr.mxu0 0.0
    %941 = vmatpush2.msra.mxu0 0.0
    %942 = vmatprep.subr.mxu0 0.0
    %943 = vmatpush2.msra.mxu0 0.0
    %944 = vmatprep.subr.mxu0 0.0
    %945 = vmatpush2.msra.mxu0 0.0
    %946 = vmatprep.subr.mxu0 0.0
    %947 = vmatpush2.msra.mxu0 0.0
    %948 = vmatprep.subr.mxu0 0.0
    %949 = vmatpush2.msra.mxu0 0.0
    %950 = vmatprep.subr.mxu0 0.0
    %951 = vmatpush2.msra.mxu0 0.0
    %952 = vmatprep.subr.mxu0 0.0
    %953 = vmatpush2.msra.mxu0 0.0
    %954 = vmatprep.mubr.f32.mxu0 0.0
    %955 = vmatmul.mubr.f32.gmra.mxu0 %v818
    %v956 = vpop.f32.mrf.mxu0
    %v957 = vadd.f32 0.0, %v956
    %v958 = vpop.f32.mrf.mxu0
    %v959 = vadd.f32 0.0, %v958
    %960 = vdwg.mxu0
    %v961 = vadd.f32 %v274, %v886
    %v962 = vadd.f32 %v276, %v888
    %v963 = vadd.f32 %v387, %v957
    %v964 = vadd.f32 %v389, %v959
    %v965 = vmul.f32 %v961, 0.5
    %v966 = vtanh.pop %v965
    %v967 = vmul.f32 %v966, 0.5
    %v968 = vadd.f32 %v967, 0.5
    %v969 = vmul.f32 %v962, 0.5
    %v970 = vtanh.pop %v969
    %v971 = vmul.f32 %v970, 0.5
    %v972 = vadd.f32 %v971, 0.5
    %v973 = vtanh.pop %v963
    %v974 = vmul.f32 %v964, 0.5
    %v975 = vtanh.pop %v974
    %v976 = vmul.f32 %v975, 0.5
    %v977 = vadd.f32 %v976, 0.5
    %v978 = vmul.f32 %v972, %v816
    %v979 = vmul.f32 %v968, %v973
    %v980 = vadd.f32 %v978, %v979
    %v981 = vtanh.pop %v980
    %v982 = vmul.f32 %v977, %v981
    %983 = vmatprep.subr.mxu0 %v476
    %984 = vmatpush1.msra.mxu0 %v475
    %985 = vmatprep.subr.mxu0 %v472
    %986 = vmatpush1.msra.mxu0 %v471
    %987 = vmatprep.subr.mxu0 %v468
    %988 = vmatpush1.msra.mxu0 %v467
    %989 = vmatprep.subr.mxu0 %v464
    %990 = vmatpush1.msra.mxu0 %v463
    %991 = vmatprep.subr.mxu0 %v460
    %992 = vmatpush1.msra.mxu0 %v459
    %993 = vmatprep.subr.mxu0 %v456
    %994 = vmatpush1.msra.mxu0 %v455
    %995 = vmatprep.subr.mxu0 %v452
    %996 = vmatpush1.msra.mxu0 %v451
    %997 = vmatprep.subr.mxu0 %v448
    %998 = vmatpush1.msra.mxu0 %v447
    %999 = vmatprep.subr.mxu0 %v444
    %1000 = vmatpush1.msra.mxu0 %v443
    %1001 = vmatprep.subr.mxu0 %v440
    %1002 = vmatpush1.msra.mxu0 %v439
    %1003 = vmatprep.subr.mxu0 %v436
    %1004 = vmatpush1.msra.mxu0 %v435
    %1005 = vmatprep.subr.mxu0 %v432
    %1006 = vmatpush1.msra.mxu0 %v431
    %1007 = vmatprep.subr.mxu0 %v428
    %1008 = vmatpush1.msra.mxu0 %v427
    %1009 = vmatprep.subr.mxu0 %v424
    %1010 = vmatpush1.msra.mxu0 %v423
    %1011 = vmatprep.subr.mxu0 %v420
    %1012 = vmatpush1.msra.mxu0 %v419
    %1013 = vmatprep.subr.mxu0 %v416
    %1014 = vmatpush1.msra.mxu0 %v415
    %1015 = vmatprep.subr.mxu0 0.0
    %1016 = vmatpush2.msra.mxu0 0.0
    %1017 = vmatprep.subr.mxu0 0.0
    %1018 = vmatpush2.msra.mxu0 0.0
    %1019 = vmatprep.subr.mxu0 0.0
    %1020 = vmatpush2.msra.mxu0 0.0
    %1021 = vmatprep.subr.mxu0 0.0
    %1022 = vmatpush2.msra.mxu0 0.0
    %1023 = vmatprep.subr.mxu0 0.0
    %1024 = vmatpush2.msra.mxu0 0.0
    %1025 = vmatprep.subr.mxu0 0.0
    %1026 = vmatpush2.msra.mxu0 0.0
    %1027 = vmatprep.subr.mxu0 0.0
    %1028 = vmatpush2.msra.mxu0 0.0
    %1029 = vmatprep.subr.mxu0 0.0
    %1030 = vmatpush2.msra.mxu0 0.0
    %1031 = vmatprep.subr.mxu0 0.0
    %1032 = vmatpush2.msra.mxu0 0.0
    %1033 = vmatprep.subr.mxu0 0.0
    %1034 = vmatpush2.msra.mxu0 0.0
    %1035 = vmatprep.subr.mxu0 0.0
    %1036 = vmatpush2.msra.mxu0 0.0
    %1037 = vmatprep.subr.mxu0 0.0
    %1038 = vmatpush2.msra.mxu0 0.0
    %1039 = vmatprep.subr.mxu0 0.0
    %1040 = vmatpush2.msra.mxu0 0.0
    %1041 = vmatprep.subr.mxu0 0.0
    %1042 = vmatpush2.msra.mxu0 0.0
    %1043 = vmatprep.subr.mxu0 0.0
    %1044 = vmatpush2.msra.mxu0 0.0
    %1045 = vmatprep.subr.mxu0 0.0
    %1046 = vmatpush2.msra.mxu0 0.0
    %1047 = vmatprep.mubr.f32.mxu0 0.0
    %1048 = vmatmul.mubr.f32.gmra.mxu0 %v982
    %v1049 = vpop.f32.mrf.mxu0
    %v1050 = vadd.f32 0.0, %v1049
    %v1051 = vpop.f32.mrf.mxu0
    %v1052 = vadd.f32 0.0, %v1051
    %1053 = vdwg.mxu0
    %1054 = vmatprep.subr.mxu0 %v478
    %1055 = vmatpush1.msra.mxu0 %v477
    %1056 = vmatprep.subr.mxu0 %v474
    %1057 = vmatpush1.msra.mxu0 %v473
    %1058 = vmatprep.subr.mxu0 %v470
    %1059 = vmatpush1.msra.mxu0 %v469
    %1060 = vmatprep.subr.mxu0 %v466
    %1061 = vmatpush1.msra.mxu0 %v465
    %1062 = vmatprep.subr.mxu0 %v462
    %1063 = vmatpush1.msra.mxu0 %v461
    %1064 = vmatprep.subr.mxu0 %v458
    %1065 = vmatpush1.msra.mxu0 %v457
    %1066 = vmatprep.subr.mxu0 %v454
    %1067 = vmatpush1.msra.mxu0 %v453
    %1068 = vmatprep.subr.mxu0 %v450
    %1069 = vmatpush1.msra.mxu0 %v449
    %1070 = vmatprep.subr.mxu0 %v446
    %1071 = vmatpush1.msra.mxu0 %v445
    %1072 = vmatprep.subr.mxu0 %v442
    %1073 = vmatpush1.msra.mxu0 %v441
    %1074 = vmatprep.subr.mxu0 %v438
    %1075 = vmatpush1.msra.mxu0 %v437
    %1076 = vmatprep.subr.mxu0 %v434
    %1077 = vmatpush1.msra.mxu0 %v433
    %1078 = vmatprep.subr.mxu0 %v430
    %1079 = vmatpush1.msra.mxu0 %v429
    %1080 = vmatprep.subr.mxu0 %v426
    %1081 = vmatpush1.msra.mxu0 %v425
    %1082 = vmatprep.subr.mxu0 %v422
    %1083 = vmatpush1.msra.mxu0 %v421
    %1084 = vmatprep.subr.mxu0 %v418
    %1085 = vmatpush1.msra.mxu0 %v417
    %1086 = vmatprep.subr.mxu0 0.0
    %1087 = vmatpush2.msra.mxu0 0.0
    %1088 = vmatprep.subr.mxu0 0.0
    %1089 = vmatpush2.msra.mxu0 0.0
    %1090 = vmatprep.subr.mxu0 0.0
    %1091 = vmatpush2.msra.mxu0 0.0
    %1092 = vmatprep.subr.mxu0 0.0
    %1093 = vmatpush2.msra.mxu0 0.0
    %1094 = vmatprep.subr.mxu0 0.0
    %1095 = vmatpush2.msra.mxu0 0.0
    %1096 = vmatprep.subr.mxu0 0.0
    %1097 = vmatpush2.msra.mxu0 0.0
    %1098 = vmatprep.subr.mxu0 0.0
    %1099 = vmatpush2.msra.mxu0 0.0
    %1100 = vmatprep.subr.mxu0 0.0
    %1101 = vmatpush2.msra.mxu0 0.0
    %1102 = vmatprep.subr.mxu0 0.0
    %1103 = vmatpush2.msra.mxu0 0.0
    %1104 = vmatprep.subr.mxu0 0.0
    %1105 = vmatpush2.msra.mxu0 0.0
    %1106 = vmatprep.subr.mxu0 0.0
    %1107 = vmatpush2.msra.mxu0 0.0
    %1108 = vmatprep.subr.mxu0 0.0
    %1109 = vmatpush2.msra.mxu0 0.0
    %1110 = vmatprep.subr.mxu0 0.0
    %1111 = vmatpush2.msra.mxu0 0.0
    %1112 = vmatprep.subr.mxu0 0.0
    %1113 = vmatpush2.msra.mxu0 0.0
    %1114 = vmatprep.subr.mxu0 0.0
    %1115 = vmatpush2.msra.mxu0 0.0
    %1116 = vmatprep.subr.mxu0 0.0
    %1117 = vmatpush2.msra.mxu0 0.0
    %1118 = vmatprep.mubr.f32.mxu0 0.0
    %1119 = vmatmul.mubr.f32.gmra.mxu0 %v982
    %v1120 = vpop.f32.mrf.mxu0
    %v1121 = vadd.f32 0.0, %v1120
    %v1122 = vpop.f32.mrf.mxu0
    %v1123 = vadd.f32 0.0, %v1122
    %1124 = vdwg.mxu0
    %v1125 = vadd.f32 %v280, %v1050
    %v1126 = vadd.f32 %v282, %v1052
    %v1127 = vadd.f32 %v393, %v1121
    %v1128 = vadd.f32 %v395, %v1123
    %v1129 = vmul.f32 %v1125, 0.5
    %v1130 = vtanh.pop %v1129
    %v1131 = vmul.f32 %v1130, 0.5
    %v1132 = vadd.f32 %v1131, 0.5
    %v1133 = vmul.f32 %v1126, 0.5
    %v1134 = vtanh.pop %v1133
    %v1135 = vmul.f32 %v1134, 0.5
    %v1136 = vadd.f32 %v1135, 0.5
    %v1137 = vtanh.pop %v1127
    %v1138 = vmul.f32 %v1128, 0.5
    %v1139 = vtanh.pop %v1138
    %v1140 = vmul.f32 %v1139, 0.5
    %v1141 = vadd.f32 %v1140, 0.5
    %v1142 = vmul.f32 %v1136, %v980
    %v1143 = vmul.f32 %v1132, %v1137
    %v1144 = vadd.f32 %v1142, %v1143
    %v1145 = vtanh.pop %v1144
    %v1146 = vmul.f32 %v1141, %v1145
    %1147 = vmatprep.subr.mxu0 %v476
    %1148 = vmatpush1.msra.mxu0 %v475
    %1149 = vmatprep.subr.mxu0 %v472
    %1150 = vmatpush1.msra.mxu0 %v471
    %1151 = vmatprep.subr.mxu0 %v468
    %1152 = vmatpush1.msra.mxu0 %v467
    %1153 = vmatprep.subr.mxu0 %v464
    %1154 = vmatpush1.msra.mxu0 %v463
    %1155 = vmatprep.subr.mxu0 %v460
    %1156 = vmatpush1.msra.mxu0 %v459
    %1157 = vmatprep.subr.mxu0 %v456
    %1158 = vmatpush1.msra.mxu0 %v455
    %1159 = vmatprep.subr.mxu0 %v452
    %1160 = vmatpush1.msra.mxu0 %v451
    %1161 = vmatprep.subr.mxu0 %v448
    %1162 = vmatpush1.msra.mxu0 %v447
    %1163 = vmatprep.subr.mxu0 %v444
    %1164 = vmatpush1.msra.mxu0 %v443
    %1165 = vmatprep.subr.mxu0 %v440
    %1166 = vmatpush1.msra.mxu0 %v439
    %1167 = vmatprep.subr.mxu0 %v436
    %1168 = vmatpush1.msra.mxu0 %v435
    %1169 = vmatprep.subr.mxu0 %v432
    %1170 = vmatpush1.msra.mxu0 %v431
    %1171 = vmatprep.subr.mxu0 %v428
    %1172 = vmatpush1.msra.mxu0 %v427
    %1173 = vmatprep.subr.mxu0 %v424
    %1174 = vmatpush1.msra.mxu0 %v423
    %1175 = vmatprep.subr.mxu0 %v420
    %1176 = vmatpush1.msra.mxu0 %v419
    %1177 = vmatprep.subr.mxu0 %v416
    %1178 = vmatpush1.msra.mxu0 %v415
    %1179 = vmatprep.subr.mxu0 0.0
    %1180 = vmatpush2.msra.mxu0 0.0
    %1181 = vmatprep.subr.mxu0 0.0
    %1182 = vmatpush2.msra.mxu0 0.0
    %1183 = vmatprep.subr.mxu0 0.0
    %1184 = vmatpush2.msra.mxu0 0.0
    %1185 = vmatprep.subr.mxu0 0.0
    %1186 = vmatpush2.msra.mxu0 0.0
    %1187 = vmatprep.subr.mxu0 0.0
    %1188 = vmatpush2.msra.mxu0 0.0
    %1189 = vmatprep.subr.mxu0 0.0
    %1190 = vmatpush2.msra.mxu0 0.0
    %1191 = vmatprep.subr.mxu0 0.0
    %1192 = vmatpush2.msra.mxu0 0.0
    %1193 = vmatprep.subr.mxu0 0.0
    %1194 = vmatpush2.msra.mxu0 0.0
    %1195 = vmatprep.subr.mxu0 0.0
    %1196 = vmatpush2.msra.mxu0 0.0
    %1197 = vmatprep.subr.mxu0 0.0
    %1198 = vmatpush2.msra.mxu0 0.0
    %1199 = vmatprep.subr.mxu0 0.0
    %1200 = vmatpush2.msra.mxu0 0.0
    %1201 = vmatprep.subr.mxu0 0.0
    %1202 = vmatpush2.msra.mxu0 0.0
    %1203 = vmatprep.subr.mxu0 0.0
    %1204 = vmatpush2.msra.mxu0 0.0
    %1205 = vmatprep.subr.mxu0 0.0
    %1206 = vmatpush2.msra.mxu0 0.0
    %1207 = vmatprep.subr.mxu0 0.0
    %1208 = vmatpush2.msra.mxu0 0.0
    %1209 = vmatprep.subr.mxu0 0.0
    %1210 = vmatpush2.msra.mxu0 0.0
    %1211 = vmatprep.mubr.f32.mxu0 0.0
    %1212 = vmatmul.mubr.f32.gmra.mxu0 %v1146
    %v1213 = vpop.f32.mrf.mxu0
    %v1214 = vadd.f32 0.0, %v1213
    %v1215 = vpop.f32.mrf.mxu0
    %v1216 = vadd.f32 0.0, %v1215
    %1217 = vdwg.mxu0
    %1218 = vmatprep.subr.mxu0 %v478
    %1219 = vmatpush1.msra.mxu0 %v477
    %1220 = vmatprep.subr.mxu0 %v474
    %1221 = vmatpush1.msra.mxu0 %v473
    %1222 = vmatprep.subr.mxu0 %v470
    %1223 = vmatpush1.msra.mxu0 %v469
    %1224 = vmatprep.subr.mxu0 %v466
    %1225 = vmatpush1.msra.mxu0 %v465
    %1226 = vmatprep.subr.mxu0 %v462
    %1227 = vmatpush1.msra.mxu0 %v461
    %1228 = vmatprep.subr.mxu0 %v458
    %1229 = vmatpush1.msra.mxu0 %v457
    %1230 = vmatprep.subr.mxu0 %v454
    %1231 = vmatpush1.msra.mxu0 %v453
    %1232 = vmatprep.subr.mxu0 %v450
    %1233 = vmatpush1.msra.mxu0 %v449
    %1234 = vmatprep.subr.mxu0 %v446
    %1235 = vmatpush1.msra.mxu0 %v445
    %1236 = vmatprep.subr.mxu0 %v442
    %1237 = vmatpush1.msra.mxu0 %v441
    %1238 = vmatprep.subr.mxu0 %v438
    %1239 = vmatpush1.msra.mxu0 %v437
    %1240 = vmatprep.subr.mxu0 %v434
    %1241 = vmatpush1.msra.mxu0 %v433
    %1242 = vmatprep.subr.mxu0 %v430
    %1243 = vmatpush1.msra.mxu0 %v429
    %1244 = vmatprep.subr.mxu0 %v426
    %1245 = vmatpush1.msra.mxu0 %v425
    %1246 = vmatprep.subr.mxu0 %v422
    %1247 = vmatpush1.msra.mxu0 %v421
    %1248 = vmatprep.subr.mxu0 %v418
    %1249 = vmatpush1.msra.mxu0 %v417
    %1250 = vmatprep.subr.mxu0 0.0
    %1251 = vmatpush2.msra.mxu0 0.0
    %1252 = vmatprep.subr.mxu0 0.0
    %1253 = vmatpush2.msra.mxu0 0.0
    %1254 = vmatprep.subr.mxu0 0.0
    %1255 = vmatpush2.msra.mxu0 0.0
    %1256 = vmatprep.subr.mxu0 0.0
    %1257 = vmatpush2.msra.mxu0 0.0
    %1258 = vmatprep.subr.mxu0 0.0
    %1259 = vmatpush2.msra.mxu0 0.0
    %1260 = vmatprep.subr.mxu0 0.0
    %1261 = vmatpush2.msra.mxu0 0.0
    %1262 = vmatprep.subr.mxu0 0.0
    %1263 = vmatpush2.msra.mxu0 0.0
    %1264 = vmatprep.subr.mxu0 0.0
    %1265 = vmatpush2.msra.mxu0 0.0
    %1266 = vmatprep.subr.mxu0 0.0
    %1267 = vmatpush2.msra.mxu0 0.0
    %1268 = vmatprep.subr.mxu0 0.0
    %1269 = vmatpush2.msra.mxu0 0.0
    %1270 = vmatprep.subr.mxu0 0.0
    %1271 = vmatpush2.msra.mxu0 0.0
    %1272 = vmatprep.subr.mxu0 0.0
    %1273 = vmatpush2.msra.mxu0 0.0
    %1274 = vmatprep.subr.mxu0 0.0
    %1275 = vmatpush2.msra.mxu0 0.0
    %1276 = vmatprep.subr.mxu0 0.0
    %1277 = vmatpush2.msra.mxu0 0.0
    %1278 = vmatprep.subr.mxu0 0.0
    %1279 = vmatpush2.msra.mxu0 0.0
    %1280 = vmatprep.subr.mxu0 0.0
    %1281 = vmatpush2.msra.mxu0 0.0
    %1282 = vmatprep.mubr.f32.mxu0 0.0
    %1283 = vmatmul.mubr.f32.gmra.mxu0 %v1146
    %v1284 = vpop.f32.mrf.mxu0
    %v1285 = vadd.f32 0.0, %v1284
    %v1286 = vpop.f32.mrf.mxu0
    %v1287 = vadd.f32 0.0, %v1286
    %1288 = vdwg.mxu0
    %v1289 = vadd.f32 %v286, %v1214
    %v1290 = vadd.f32 %v288, %v1216
    %v1291 = vadd.f32 %v399, %v1285
    %v1292 = vadd.f32 %v401, %v1287
    %v1293 = vmul.f32 %v1289, 0.5
    %v1294 = vtanh.pop %v1293
    %v1295 = vmul.f32 %v1294, 0.5
    %v1296 = vadd.f32 %v1295, 0.5
    %v1297 = vmul.f32 %v1290, 0.5
    %v1298 = vtanh.pop %v1297
    %v1299 = vmul.f32 %v1298, 0.5
    %v1300 = vadd.f32 %v1299, 0.5
    %v1301 = vtanh.pop %v1291
    %v1302 = vmul.f32 %v1292, 0.5
    %v1303 = vtanh.pop %v1302
    %v1304 = vmul.f32 %v1303, 0.5
    %v1305 = vadd.f32 %v1304, 0.5
    %v1306 = vmul.f32 %v1300, %v1144
    %v1307 = vmul.f32 %v1296, %v1301
    %v1308 = vadd.f32 %v1306, %v1307
    %v1309 = vtanh.pop %v1308
    %v1310 = vmul.f32 %v1305, %v1309
    %1311 = vmatprep.subr.mxu0 %v476
    %1312 = vmatpush1.msra.mxu0 %v475
    %1313 = vmatprep.subr.mxu0 %v472
    %1314 = vmatpush1.msra.mxu0 %v471
    %1315 = vmatprep.subr.mxu0 %v468
    %1316 = vmatpush1.msra.mxu0 %v467
    %1317 = vmatprep.subr.mxu0 %v464
    %1318 = vmatpush1.msra.mxu0 %v463
    %1319 = vmatprep.subr.mxu0 %v460
    %1320 = vmatpush1.msra.mxu0 %v459
    %1321 = vmatprep.subr.mxu0 %v456
    %1322 = vmatpush1.msra.mxu0 %v455
    %1323 = vmatprep.subr.mxu0 %v452
    %1324 = vmatpush1.msra.mxu0 %v451
    %1325 = vmatprep.subr.mxu0 %v448
    %1326 = vmatpush1.msra.mxu0 %v447
    %1327 = vmatprep.subr.mxu0 %v444
    %1328 = vmatpush1.msra.mxu0 %v443
    %1329 = vmatprep.subr.mxu0 %v440
    %1330 = vmatpush1.msra.mxu0 %v439
    %1331 = vmatprep.subr.mxu0 %v436
    %1332 = vmatpush1.msra.mxu0 %v435
    %1333 = vmatprep.subr.mxu0 %v432
    %1334 = vmatpush1.msra.mxu0 %v431
    %1335 = vmatprep.subr.mxu0 %v428
    %1336 = vmatpush1.msra.mxu0 %v427
    %1337 = vmatprep.subr.mxu0 %v424
    %1338 = vmatpush1.msra.mxu0 %v423
    %1339 = vmatprep.subr.mxu0 %v420
    %1340 = vmatpush1.msra.mxu0 %v419
    %1341 = vmatprep.subr.mxu0 %v416
    %1342 = vmatpush1.msra.mxu0 %v415
    %1343 = vmatprep.subr.mxu0 0.0
    %1344 = vmatpush2.msra.mxu0 0.0
    %1345 = vmatprep.subr.mxu0 0.0
    %1346 = vmatpush2.msra.mxu0 0.0
    %1347 = vmatprep.subr.mxu0 0.0
    %1348 = vmatpush2.msra.mxu0 0.0
    %1349 = vmatprep.subr.mxu0 0.0
    %1350 = vmatpush2.msra.mxu0 0.0
    %1351 = vmatprep.subr.mxu0 0.0
    %1352 = vmatpush2.msra.mxu0 0.0
    %1353 = vmatprep.subr.mxu0 0.0
    %1354 = vmatpush2.msra.mxu0 0.0
    %1355 = vmatprep.subr.mxu0 0.0
    %1356 = vmatpush2.msra.mxu0 0.0
    %1357 = vmatprep.subr.mxu0 0.0
    %1358 = vmatpush2.msra.mxu0 0.0
    %1359 = vmatprep.subr.mxu0 0.0
    %1360 = vmatpush2.msra.mxu0 0.0
    %1361 = vmatprep.subr.mxu0 0.0
    %1362 = vmatpush2.msra.mxu0 0.0
    %1363 = vmatprep.subr.mxu0 0.0
    %1364 = vmatpush2.msra.mxu0 0.0
    %1365 = vmatprep.subr.mxu0 0.0
    %1366 = vmatpush2.msra.mxu0 0.0
    %1367 = vmatprep.subr.mxu0 0.0
    %1368 = vmatpush2.msra.mxu0 0.0
    %1369 = vmatprep.subr.mxu0 0.0
    %1370 = vmatpush2.msra.mxu0 0.0
    %1371 = vmatprep.subr.mxu0 0.0
    %1372 = vmatpush2.msra.mxu0 0.0
    %1373 = vmatprep.subr.mxu0 0.0
    %1374 = vmatpush2.msra.mxu0 0.0
    %1375 = vmatprep.mubr.f32.mxu0 0.0
    %1376 = vmatmul.mubr.f32.gmra.mxu0 %v1310
    %v1377 = vpop.f32.mrf.mxu0
    %v1378 = vadd.f32 0.0, %v1377
    %v1379 = vpop.f32.mrf.mxu0
    %v1380 = vadd.f32 0.0, %v1379
    %1381 = vdwg.mxu0
    %1382 = vmatprep.subr.mxu0 %v478
    %1383 = vmatpush1.msra.mxu0 %v477
    %1384 = vmatprep.subr.mxu0 %v474
    %1385 = vmatpush1.msra.mxu0 %v473
    %1386 = vmatprep.subr.mxu0 %v470
    %1387 = vmatpush1.msra.mxu0 %v469
    %1388 = vmatprep.subr.mxu0 %v466
    %1389 = vmatpush1.msra.mxu0 %v465
    %1390 = vmatprep.subr.mxu0 %v462
    %1391 = vmatpush1.msra.mxu0 %v461
    %1392 = vmatprep.subr.mxu0 %v458
    %1393 = vmatpush1.msra.mxu0 %v457
    %1394 = vmatprep.subr.mxu0 %v454
    %1395 = vmatpush1.msra.mxu0 %v453
    %1396 = vmatprep.subr.mxu0 %v450
    %1397 = vmatpush1.msra.mxu0 %v449
    %1398 = vmatprep.subr.mxu0 %v446
    %1399 = vmatpush1.msra.mxu0 %v445
    %1400 = vmatprep.subr.mxu0 %v442
    %1401 = vmatpush1.msra.mxu0 %v441
    %1402 = vmatprep.subr.mxu0 %v438
    %1403 = vmatpush1.msra.mxu0 %v437
    %1404 = vmatprep.subr.mxu0 %v434
    %1405 = vmatpush1.msra.mxu0 %v433
    %1406 = vmatprep.subr.mxu0 %v430
    %1407 = vmatpush1.msra.mxu0 %v429
    %1408 = vmatprep.subr.mxu0 %v426
    %1409 = vmatpush1.msra.mxu0 %v425
    %1410 = vmatprep.subr.mxu0 %v422
    %1411 = vmatpush1.msra.mxu0 %v421
    %1412 = vmatprep.subr.mxu0 %v418
    %1413 = vmatpush1.msra.mxu0 %v417
    %1414 = vmatprep.subr.mxu0 0.0
    %1415 = vmatpush2.msra.mxu0 0.0
    %1416 = vmatprep.subr.mxu0 0.0
    %1417 = vmatpush2.msra.mxu0 0.0
    %1418 = vmatprep.subr.mxu0 0.0
    %1419 = vmatpush2.msra.mxu0 0.0
    %1420 = vmatprep.subr.mxu0 0.0
    %1421 = vmatpush2.msra.mxu0 0.0
    %1422 = vmatprep.subr.mxu0 0.0
    %1423 = vmatpush2.msra.mxu0 0.0
    %1424 = vmatprep.subr.mxu0 0.0
    %1425 = vmatpush2.msra.mxu0 0.0
    %1426 = vmatprep.subr.mxu0 0.0
    %1427 = vmatpush2.msra.mxu0 0.0
    %1428 = vmatprep.subr.mxu0 0.0
    %1429 = vmatpush2.msra.mxu0 0.0
    %1430 = vmatprep.subr.mxu0 0.0
    %1431 = vmatpush2.msra.mxu0 0.0
    %1432 = vmatprep.subr.mxu0 0.0
    %1433 = vmatpush2.msra.mxu0 0.0
    %1434 = vmatprep.subr.mxu0 0.0
    %1435 = vmatpush2.msra.mxu0 0.0
    %1436 = vmatprep.subr.mxu0 0.0
    %1437 = vmatpush2.msra.mxu0 0.0
    %1438 = vmatprep.subr.mxu0 0.0
    %1439 = vmatpush2.msra.mxu0 0.0
    %1440 = vmatprep.subr.mxu0 0.0
    %1441 = vmatpush2.msra.mxu0 0.0
    %1442 = vmatprep.subr.mxu0 0.0
    %1443 = vmatpush2.msra.mxu0 0.0
    %1444 = vmatprep.subr.mxu0 0.0
    %1445 = vmatpush2.msra.mxu0 0.0
    %1446 = vmatprep.mubr.f32.mxu0 0.0
    %1447 = vmatmul.mubr.f32.gmra.mxu0 %v1310
    %v1448 = vpop.f32.mrf.mxu0
    %v1449 = vadd.f32 0.0, %v1448
    %v1450 = vpop.f32.mrf.mxu0
    %v1451 = vadd.f32 0.0, %v1450
    %1452 = vdwg.mxu0
    %v1453 = vadd.f32 %v292, %v1378
    %v1454 = vadd.f32 %v294, %v1380
    %v1455 = vadd.f32 %v405, %v1449
    %v1456 = vadd.f32 %v407, %v1451
    %v1457 = vmul.f32 %v1453, 0.5
    %v1458 = vtanh.pop %v1457
    %v1459 = vmul.f32 %v1458, 0.5
    %v1460 = vadd.f32 %v1459, 0.5
    %v1461 = vmul.f32 %v1454, 0.5
    %v1462 = vtanh.pop %v1461
    %v1463 = vmul.f32 %v1462, 0.5
    %v1464 = vadd.f32 %v1463, 0.5
    %v1465 = vtanh.pop %v1455
    %v1466 = vmul.f32 %v1456, 0.5
    %v1467 = vtanh.pop %v1466
    %v1468 = vmul.f32 %v1467, 0.5
    %v1469 = vadd.f32 %v1468, 0.5
    %v1470 = vmul.f32 %v1464, %v1308
    %v1471 = vmul.f32 %v1460, %v1465
    %v1472 = vadd.f32 %v1470, %v1471
    %v1473 = vtanh.pop %v1472
    %v1474 = vmul.f32 %v1469, %v1473
    %1475 = vmatprep.subr.mxu0 %v476
    %1476 = vmatpush1.msra.mxu0 %v475
    %1477 = vmatprep.subr.mxu0 %v472
    %1478 = vmatpush1.msra.mxu0 %v471
    %1479 = vmatprep.subr.mxu0 %v468
    %1480 = vmatpush1.msra.mxu0 %v467
    %1481 = vmatprep.subr.mxu0 %v464
    %1482 = vmatpush1.msra.mxu0 %v463
    %1483 = vmatprep.subr.mxu0 %v460
    %1484 = vmatpush1.msra.mxu0 %v459
    %1485 = vmatprep.subr.mxu0 %v456
    %1486 = vmatpush1.msra.mxu0 %v455
    %1487 = vmatprep.subr.mxu0 %v452
    %1488 = vmatpush1.msra.mxu0 %v451
    %1489 = vmatprep.subr.mxu0 %v448
    %1490 = vmatpush1.msra.mxu0 %v447
    %1491 = vmatprep.subr.mxu0 %v444
    %1492 = vmatpush1.msra.mxu0 %v443
    %1493 = vmatprep.subr.mxu0 %v440
    %1494 = vmatpush1.msra.mxu0 %v439
    %1495 = vmatprep.subr.mxu0 %v436
    %1496 = vmatpush1.msra.mxu0 %v435
    %1497 = vmatprep.subr.mxu0 %v432
    %1498 = vmatpush1.msra.mxu0 %v431
    %1499 = vmatprep.subr.mxu0 %v428
    %1500 = vmatpush1.msra.mxu0 %v427
    %1501 = vmatprep.subr.mxu0 %v424
    %1502 = vmatpush1.msra.mxu0 %v423
    %1503 = vmatprep.subr.mxu0 %v420
    %1504 = vmatpush1.msra.mxu0 %v419
    %1505 = vmatprep.subr.mxu0 %v416
    %1506 = vmatpush1.msra.mxu0 %v415
    %1507 = vmatprep.subr.mxu0 0.0
    %1508 = vmatpush2.msra.mxu0 0.0
    %1509 = vmatprep.subr.mxu0 0.0
    %1510 = vmatpush2.msra.mxu0 0.0
    %1511 = vmatprep.subr.mxu0 0.0
    %1512 = vmatpush2.msra.mxu0 0.0
    %1513 = vmatprep.subr.mxu0 0.0
    %1514 = vmatpush2.msra.mxu0 0.0
    %1515 = vmatprep.subr.mxu0 0.0
    %1516 = vmatpush2.msra.mxu0 0.0
    %1517 = vmatprep.subr.mxu0 0.0
    %1518 = vmatpush2.msra.mxu0 0.0
    %1519 = vmatprep.subr.mxu0 0.0
    %1520 = vmatpush2.msra.mxu0 0.0
    %1521 = vmatprep.subr.mxu0 0.0
    %1522 = vmatpush2.msra.mxu0 0.0
    %1523 = vmatprep.subr.mxu0 0.0
    %1524 = vmatpush2.msra.mxu0 0.0
    %1525 = vmatprep.subr.mxu0 0.0
    %1526 = vmatpush2.msra.mxu0 0.0
    %1527 = vmatprep.subr.mxu0 0.0
    %1528 = vmatpush2.msra.mxu0 0.0
    %1529 = vmatprep.subr.mxu0 0.0
    %1530 = vmatpush2.msra.mxu0 0.0
    %1531 = vmatprep.subr.mxu0 0.0
    %1532 = vmatpush2.msra.mxu0 0.0
    %1533 = vmatprep.subr.mxu0 0.0
    %1534 = vmatpush2.msra.mxu0 0.0
    %1535 = vmatprep.subr.mxu0 0.0
    %1536 = vmatpush2.msra.mxu0 0.0
    %1537 = vmatprep.subr.mxu0 0.0
    %1538 = vmatpush2.msra.mxu0 0.0
    %1539 = vmatprep.mubr.f32.mxu0 0.0
    %1540 = vmatmul.mubr.f32.gmra.mxu0 %v1474
    %v1541 = vpop.f32.mrf.mxu0
    %v1542 = vadd.f32 0.0, %v1541
    %v1543 = vpop.f32.mrf.mxu0
    %v1544 = vadd.f32 0.0, %v1543
    %1545 = vdwg.mxu0
    %1546 = vmatprep.subr.mxu0 %v478
    %1547 = vmatpush1.msra.mxu0 %v477
    %1548 = vmatprep.subr.mxu0 %v474
    %1549 = vmatpush1.msra.mxu0 %v473
    %1550 = vmatprep.subr.mxu0 %v470
    %1551 = vmatpush1.msra.mxu0 %v469
    %1552 = vmatprep.subr.mxu0 %v466
    %1553 = vmatpush1.msra.mxu0 %v465
    %1554 = vmatprep.subr.mxu0 %v462
    %1555 = vmatpush1.msra.mxu0 %v461
    %1556 = vmatprep.subr.mxu0 %v458
    %1557 = vmatpush1.msra.mxu0 %v457
    %1558 = vmatprep.subr.mxu0 %v454
    %1559 = vmatpush1.msra.mxu0 %v453
    %1560 = vmatprep.subr.mxu0 %v450
    %1561 = vmatpush1.msra.mxu0 %v449
    %1562 = vmatprep.subr.mxu0 %v446
    %1563 = vmatpush1.msra.mxu0 %v445
    %1564 = vmatprep.subr.mxu0 %v442
    %1565 = vmatpush1.msra.mxu0 %v441
    %1566 = vmatprep.subr.mxu0 %v438
    %1567 = vmatpush1.msra.mxu0 %v437
    %1568 = vmatprep.subr.mxu0 %v434
    %1569 = vmatpush1.msra.mxu0 %v433
    %1570 = vmatprep.subr.mxu0 %v430
    %1571 = vmatpush1.msra.mxu0 %v429
    %1572 = vmatprep.subr.mxu0 %v426
    %1573 = vmatpush1.msra.mxu0 %v425
    %1574 = vmatprep.subr.mxu0 %v422
    %1575 = vmatpush1.msra.mxu0 %v421
    %1576 = vmatprep.subr.mxu0 %v418
    %1577 = vmatpush1.msra.mxu0 %v417
    %1578 = vmatprep.subr.mxu0 0.0
    %1579 = vmatpush2.msra.mxu0 0.0
    %1580 = vmatprep.subr.mxu0 0.0
    %1581 = vmatpush2.msra.mxu0 0.0
    %1582 = vmatprep.subr.mxu0 0.0
    %1583 = vmatpush2.msra.mxu0 0.0
    %1584 = vmatprep.subr.mxu0 0.0
    %1585 = vmatpush2.msra.mxu0 0.0
    %1586 = vmatprep.subr.mxu0 0.0
    %1587 = vmatpush2.msra.mxu0 0.0
    %1588 = vmatprep.subr.mxu0 0.0
    %1589 = vmatpush2.msra.mxu0 0.0
    %1590 = vmatprep.subr.mxu0 0.0
    %1591 = vmatpush2.msra.mxu0 0.0
    %1592 = vmatprep.subr.mxu0 0.0
    %1593 = vmatpush2.msra.mxu0 0.0
    %1594 = vmatprep.subr.mxu0 0.0
    %1595 = vmatpush2.msra.mxu0 0.0
    %1596 = vmatprep.subr.mxu0 0.0
    %1597 = vmatpush2.msra.mxu0 0.0
    %1598 = vmatprep.subr.mxu0 0.0
    %1599 = vmatpush2.msra.mxu0 0.0
    %1600 = vmatprep.subr.mxu0 0.0
    %1601 = vmatpush2.msra.mxu0 0.0
    %1602 = vmatprep.subr.mxu0 0.0
    %1603 = vmatpush2.msra.mxu0 0.0
    %1604 = vmatprep.subr.mxu0 0.0
    %1605 = vmatpush2.msra.mxu0 0.0
    %1606 = vmatprep.subr.mxu0 0.0
    %1607 = vmatpush2.msra.mxu0 0.0
    %1608 = vmatprep.subr.mxu0 0.0
    %1609 = vmatpush2.msra.mxu0 0.0
    %1610 = vmatprep.mubr.f32.mxu0 0.0
    %1611 = vmatmul.mubr.f32.gmra.mxu0 %v1474
    %v1612 = vpop.f32.mrf.mxu0
    %v1613 = vadd.f32 0.0, %v1612
    %v1614 = vpop.f32.mrf.mxu0
    %v1615 = vadd.f32 0.0, %v1614
    %1616 = vdwg.mxu0
    %v1617 = vadd.f32 %v298, %v1542
    %v1618 = vadd.f32 %v300, %v1544
    %v1619 = vadd.f32 %v411, %v1613
    %v1620 = vadd.f32 %v413, %v1615
    %v1621 = vmul.f32 %v1617, 0.5
    %v1622 = vtanh.pop %v1621
    %v1623 = vmul.f32 %v1622, 0.5
    %v1624 = vadd.f32 %v1623, 0.5
    %v1625 = vmul.f32 %v1618, 0.5
    %v1626 = vtanh.pop %v1625
    %v1627 = vmul.f32 %v1626, 0.5
    %v1628 = vadd.f32 %v1627, 0.5
    %v1629 = vtanh.pop %v1619
    %v1630 = vmul.f32 %v1620, 0.5
    %v1631 = vtanh.pop %v1630
    %v1632 = vmul.f32 %v1631, 0.5
    %v1633 = vadd.f32 %v1632, 0.5
    %v1634 = vmul.f32 %v1628, %v1472
    %v1635 = vmul.f32 %v1624, %v1629
    %v1636 = vadd.f32 %v1634, %v1635
    %v1637 = vtanh.pop %v1636
    %v1638 = vmul.f32 %v1633, %v1637
    %v1639 = vld [vmem:[%s3] sm:$0xff]
    %v1640 = vld [vmem:[%s3 + $0x8] sm:$0xff]
    %v1641 = vld [vmem:[%s3 + $0x10] sm:$0xff]
    %v1642 = vld [vmem:[%s3 + $0x18] sm:$0xff]
    %v1643 = vld [vmem:[%s3 + $0x20] sm:$0xff]
    %v1644 = vld [vmem:[%s3 + $0x28] sm:$0xff]
    %v1645 = vld [vmem:[%s3 + $0x30] sm:$0xff]
    %v1646 = vld [vmem:[%s3 + $0x38] sm:$0xff]
    %v1647 = vld [vmem:[%s3 + $0x40] sm:$0xff]
    %v1648 = vld [vmem:[%s3 + $0x48] sm:$0xff]
    %v1649 = vld [vmem:[%s3 + $0x50] sm:$0xff]
    %v1650 = vld [vmem:[%s3 + $0x58] sm:$0xff]
    %v1651 = vld [vmem:[%s3 + $0x60] sm:$0xff]
    %v1652 = vld [vmem:[%s3 + $0x68] sm:$0xff]
    %v1653 = vld [vmem:[%s3 + $0x70] sm:$0xff]
    %v1654 = vld [vmem:[%s3 + $0x78] sm:$0xff]
    %v1655 = vld [vmem:[%s4] sm:$0x1]
    %v1657 = vlaneseq
    %v1658 = vshrl.u32 %v1657, 7
    %v1659 = vsub.s32 0, %v1658
    %v1660 = vrot.slane %v1655, %v1659
    %1662 = vmatprep.subr.mxu0 0.0
    %1663 = vmatpush1.msra.mxu0 %v1654
    %1664 = vmatprep.subr.mxu0 0.0
    %1665 = vmatpush1.msra.mxu0 %v1653
    %1666 = vmatprep.subr.mxu0 0.0
    %1667 = vmatpush1.msra.mxu0 %v1652
    %1668 = vmatprep.subr.mxu0 0.0
    %1669 = vmatpush1.msra.mxu0 %v1651
    %1670 = vmatprep.subr.mxu0 0.0
    %1671 = vmatpush1.msra.mxu0 %v1650
    %1672 = vmatprep.subr.mxu0 0.0
    %1673 = vmatpush1.msra.mxu0 %v1649
    %1674 = vmatprep.subr.mxu0 0.0
    %1675 = vmatpush1.msra.mxu0 %v1648
    %1676 = vmatprep.subr.mxu0 0.0
    %1677 = vmatpush1.msra.mxu0 %v1647
    %1678 = vmatprep.subr.mxu0 0.0
    %1679 = vmatpush1.msra.mxu0 %v1646
    %1680 = vmatprep.subr.mxu0 0.0
    %1681 = vmatpush1.msra.mxu0 %v1645
    %1682 = vmatprep.subr.mxu0 0.0
    %1683 = vmatpush1.msra.mxu0 %v1644
    %1684 = vmatprep.subr.mxu0 0.0
    %1685 = vmatpush1.msra.mxu0 %v1643
    %1686 = vmatprep.subr.mxu0 0.0
    %1687 = vmatpush1.msra.mxu0 %v1642
    %1688 = vmatprep.subr.mxu0 0.0
    %1689 = vmatpush1.msra.mxu0 %v1641
    %1690 = vmatprep.subr.mxu0 0.0
    %1691 = vmatpush1.msra.mxu0 %v1640
    %1692 = vmatprep.subr.mxu0 0.0
    %1693 = vmatpush1.msra.mxu0 %v1639
    %1694 = vmatprep.subr.mxu0 0.0
    %1695 = vmatpush2.msra.mxu0 0.0
    %1696 = vmatprep.subr.mxu0 0.0
    %1697 = vmatpush2.msra.mxu0 0.0
    %1698 = vmatprep.subr.mxu0 0.0
    %1699 = vmatpush2.msra.mxu0 0.0
    %1700 = vmatprep.subr.mxu0 0.0
    %1701 = vmatpush2.msra.mxu0 0.0
    %1702 = vmatprep.subr.mxu0 0.0
    %1703 = vmatpush2.msra.mxu0 0.0
    %1704 = vmatprep.subr.mxu0 0.0
    %1705 = vmatpush2.msra.mxu0 0.0
    %1706 = vmatprep.subr.mxu0 0.0
    %1707 = vmatpush2.msra.mxu0 0.0
    %1708 = vmatprep.subr.mxu0 0.0
    %1709 = vmatpush2.msra.mxu0 0.0
    %1710 = vmatprep.subr.mxu0 0.0
    %1711 = vmatpush2.msra.mxu0 0.0
    %1712 = vmatprep.subr.mxu0 0.0
    %1713 = vmatpush2.msra.mxu0 0.0
    %1714 = vmatprep.subr.mxu0 0.0
    %1715 = vmatpush2.msra.mxu0 0.0
    %1716 = vmatprep.subr.mxu0 0.0
    %1717 = vmatpush2.msra.mxu0 0.0
    %1718 = vmatprep.subr.mxu0 0.0
    %1719 = vmatpush2.msra.mxu0 0.0
    %1720 = vmatprep.subr.mxu0 0.0
    %1721 = vmatpush2.msra.mxu0 0.0
    %1722 = vmatprep.subr.mxu0 0.0
    %1723 = vmatpush2.msra.mxu0 0.0
    %1724 = vmatprep.subr.mxu0 0.0
    %1725 = vmatpush2.msra.mxu0 0.0
    %1726 = vmatprep.mubr.f32.mxu0 0.0
    %1727 = vmatmul.mubr.f32.gmra.mxu0 %v1638
    %v1728 = vpop.f32.mrf.mxu0
    %v1729 = vadd.f32 %v1660, %v1728
    %v1730 = vpop.f32.mrf.mxu0
    %1731 = vdwg.mxu0
    %vm1732 = vcmask 203776
    %v1733 = vsel %vm1732, %v1729, -inf
    %1734 = vmax.xlane.f32.xlu0 %v1733
    %v1735 = vpop.xlane.xlu0 %1734
    %v1736 = vsub.f32 %v1729, %v1735
    %v1737 = vmul.f32 %v1736, 1.442695
    %v1738 = vpow.pop %v1737
    %v1739 = vsel %vm1732, %v1738, 0.0
    %1740 = vadd.xlane.f32.xlu0 %v1739
    %v1741 = vpop.xlane.xlu0 %1740
    %v1742 = vrcp.pop %v1741
    %v1743 = vmul.f32 %v1738, %v1742
    %vm1744 = vcmask 408776
    %v1745 = vsel %vm1744, %v1729, -inf
    %1746 = vmax.xlane.f32.xlu0 %v1745
    %v1747 = vpop.xlane.xlu0 %1746
    %v1748 = vsub.f32 %v1729, %v1747
    %v1749 = vmul.f32 %v1748, 1.442695
    %v1750 = vpow.pop %v1749
    %1752 = vrot.lane.b32.xlu0 %v1750, 103
    %v1753 = vpop.permute.xlu0 %1752
    %v1755 = vsel %vm1732, %v1753, 0.0
    %1756 = vadd.xlane.f32.xlu0 %v1755
    %v1757 = vpop.xlane.xlu0 %1756
    %v1758 = vrcp.pop %v1757
    %v1759 = vmul.f32 %v1750, %v1758
    %vm1760 = vcmask 482704
    %v1761 = vsel %vm1760, %v1729, -inf
    %1762 = vmax.xlane.f32.xlu0 %v1761
    %v1763 = vpop.xlane.xlu0 %1762
    %v1764 = vsub.f32 %v1729, %v1763
    %v1765 = vmul.f32 %v1764, 1.442695
    %v1766 = vpow.pop %v1765
    %1768 = vrot.lane.b32.xlu0 %v1766, 78
    %v1769 = vpop.permute.xlu0 %1768
    %vm1771 = vcmask 72704
    %v1772 = vsel %vm1771, %v1769, 0.0
    %1773 = vadd.xlane.f32.xlu0 %v1772
    %v1774 = vpop.xlane.xlu0 %1773
    %v1775 = vrcp.pop %v1774
    %v1776 = vmul.f32 %v1766, %v1775
    %v1777 = vld [vmem:[%s5] sm:$0x3]
    %v1778 = vld [vmem:[%s5 + $0x2] sm:$0x3]
    %v1779 = vld [vmem:[%s5 + $0x4] sm:$0x3]
    %v1780 = vld [vmem:[%s5 + $0x6] sm:$0x3]
    %v1781 = vld [vmem:[%s5 + $0x8] sm:$0x3]
    %v1782 = vld [vmem:[%s5 + $0xa] sm:$0x3]
    %v1783 = vld [vmem:[%s5 + $0xc] sm:$0x3]
    %v1784 = vld [vmem:[%s5 + $0xe] sm:$0x3]
    %v1786 = vcombine.high %v1743, %v1743
    %v1788 = vunpack.c.l.s4 1966171168
    %v1789 = vunpack.c.0.s8 %v1788
    %v1790 = vlaneseq
    %v1791 = vshrl.u32 %v1790, 7
    %v1792 = vsub.s32 %v1789, %v1791
    %v1793 = vrot.slane %v1743, %v1792
    %v1795 = vunpack.c.l.s4 1966171168
    %v1796 = vunpack.c.0.s8 %v1795
    %v1797 = vlaneseq
    %v1798 = vshrl.u32 %v1797, 7
    %v1799 = vsub.s32 %v1796, %v1798
    %v1800 = vrot.slane %v1786, %v1799
    %v1801 = vcombine.high %v1793, %v1793
    %v1802 = vcombine.high %v1800, %v1800
    %v1804 = vunpack.c.l.s4 1966171168
    %v1805 = vunpack.c.0.s8 %v1804
    %v1806 = vlaneseq
    %v1807 = vshrl.u32 %v1806, 7
    %v1808 = vsub.s32 %v1805, %v1807
    %v1809 = vrot.slane %v1793, %v1808
    %v1811 = vunpack.c.l.s4 1966171168
    %v1812 = vunpack.c.0.s8 %v1811
    %v1813 = vlaneseq
    %v1814 = vshrl.u32 %v1813, 7
    %v1815 = vsub.s32 %v1812, %v1814
    %v1816 = vrot.slane %v1800, %v1815
    %v1818 = vunpack.c.l.s4 1966171168
    %v1819 = vunpack.c.0.s8 %v1818
    %v1820 = vlaneseq
    %v1821 = vshrl.u32 %v1820, 7
    %v1822 = vsub.s32 %v1819, %v1821
    %v1823 = vrot.slane %v1801, %v1822
    %v1825 = vunpack.c.l.s4 1966171168
    %v1826 = vunpack.c.0.s8 %v1825
    %v1827 = vlaneseq
    %v1828 = vshrl.u32 %v1827, 7
    %v1829 = vsub.s32 %v1826, %v1828
    %v1830 = vrot.slane %v1802, %v1829
    %v1831 = vcombine.high %v1809, %v1809
    %v1832 = vcombine.high %v1816, %v1816
    %v1833 = vcombine.high %v1823, %v1823
    %v1834 = vcombine.high %v1830, %v1830
    %v1835 = vlaneseq
    %v1836 = vshrl.u32 %v1835, 7
    %v1837 = vsub.s32 0, %v1836
    %v1838 = vrot.slane %v1809, %v1837
    %v1839 = vlaneseq
    %v1840 = vshrl.u32 %v1839, 7
    %v1841 = vsub.s32 0, %v1840
    %v1842 = vrot.slane %v1823, %v1841
    %v1843 = vlaneseq
    %v1844 = vshrl.u32 %v1843, 7
    %v1845 = vsub.s32 0, %v1844
    %v1846 = vrot.slane %v1831, %v1845
    %v1847 = vlaneseq
    %v1848 = vshrl.u32 %v1847, 7
    %v1849 = vsub.s32 0, %v1848
    %v1850 = vrot.slane %v1833, %v1849
    %v1851 = vlaneseq
    %v1852 = vshrl.u32 %v1851, 7
    %v1853 = vsub.s32 0, %v1852
    %v1854 = vrot.slane %v1816, %v1853
    %v1855 = vlaneseq
    %v1856 = vshrl.u32 %v1855, 7
    %v1857 = vsub.s32 0, %v1856
    %v1858 = vrot.slane %v1830, %v1857
    %v1859 = vlaneseq
    %v1860 = vshrl.u32 %v1859, 7
    %v1861 = vsub.s32 0, %v1860
    %v1862 = vrot.slane %v1832, %v1861
    %v1863 = vlaneseq
    %v1864 = vshrl.u32 %v1863, 7
    %v1865 = vsub.s32 0, %v1864
    %v1866 = vrot.slane %v1834, %v1865
    %v1875 = vmul.f32 %v1838, %v1777
    %v1876 = vmul.f32 %v1842, %v1778
    %v1877 = vmul.f32 %v1846, %v1779
    %v1878 = vmul.f32 %v1850, %v1780
    %v1879 = vmul.f32 %v1854, %v1781
    %v1880 = vmul.f32 %v1858, %v1782
    %v1881 = vmul.f32 %v1862, %v1783
    %v1882 = vmul.f32 %v1866, %v1784
    %vm1883 = vcmask 197632
    %v1884 = vsel %vm1883, %v1875, 0.0
    %1885 = vadd.xlane.f32.xlu0 %v1884
    %v1886 = vpop.xlane.xlu0 %1885
    %v1887 = vsel %vm1883, %v1876, 0.0
    %1888 = vadd.xlane.f32.xlu0 %v1887
    %v1889 = vpop.xlane.xlu0 %1888
    %v1890 = vsel %vm1883, %v1877, 0.0
    %1891 = vadd.xlane.f32.xlu0 %v1890
    %v1892 = vpop.xlane.xlu0 %1891
    %v1893 = vsel %vm1883, %v1878, 0.0
    %1894 = vadd.xlane.f32.xlu0 %v1893
    %v1895 = vpop.xlane.xlu0 %1894
    %v1896 = vsel %vm1883, %v1879, 0.0
    %1897 = vadd.xlane.f32.xlu0 %v1896
    %v1898 = vpop.xlane.xlu0 %1897
    %v1899 = vsel %vm1883, %v1880, 0.0
    %1900 = vadd.xlane.f32.xlu0 %v1899
    %v1901 = vpop.xlane.xlu0 %1900
    %v1902 = vsel %vm1883, %v1881, 0.0
    %1903 = vadd.xlane.f32.xlu0 %v1902
    %v1904 = vpop.xlane.xlu0 %1903
    %v1905 = vsel %vm1883, %v1882, 0.0
    %1906 = vadd.xlane.f32.xlu0 %v1905
    %v1907 = vpop.xlane.xlu0 %1906
    %v1909 = vcombine.high %v1759, %v1759
    %v1911 = vunpack.c.l.s4 1966171168
    %v1912 = vunpack.c.0.s8 %v1911
    %v1913 = vlaneseq
    %v1914 = vshrl.u32 %v1913, 7
    %v1915 = vsub.s32 %v1912, %v1914
    %v1916 = vrot.slane %v1759, %v1915
    %v1918 = vunpack.c.l.s4 1966171168
    %v1919 = vunpack.c.0.s8 %v1918
    %v1920 = vlaneseq
    %v1921 = vshrl.u32 %v1920, 7
    %v1922 = vsub.s32 %v1919, %v1921
    %v1923 = vrot.slane %v1909, %v1922
    %v1924 = vcombine.high %v1916, %v1916
    %v1925 = vcombine.high %v1923, %v1923
    %v1927 = vunpack.c.l.s4 1966171168
    %v1928 = vunpack.c.0.s8 %v1927
    %v1929 = vlaneseq
    %v1930 = vshrl.u32 %v1929, 7
    %v1931 = vsub.s32 %v1928, %v1930
    %v1932 = vrot.slane %v1916, %v1931
    %v1934 = vunpack.c.l.s4 1966171168
    %v1935 = vunpack.c.0.s8 %v1934
    %v1936 = vlaneseq
    %v1937 = vshrl.u32 %v1936, 7
    %v1938 = vsub.s32 %v1935, %v1937
    %v1939 = vrot.slane %v1923, %v1938
    %v1941 = vunpack.c.l.s4 1966171168
    %v1942 = vunpack.c.0.s8 %v1941
    %v1943 = vlaneseq
    %v1944 = vshrl.u32 %v1943, 7
    %v1945 = vsub.s32 %v1942, %v1944
    %v1946 = vrot.slane %v1924, %v1945
    %v1948 = vunpack.c.l.s4 1966171168
    %v1949 = vunpack.c.0.s8 %v1948
    %v1950 = vlaneseq
    %v1951 = vshrl.u32 %v1950, 7
    %v1952 = vsub.s32 %v1949, %v1951
    %v1953 = vrot.slane %v1925, %v1952
    %v1954 = vcombine.high %v1932, %v1932
    %v1955 = vcombine.high %v1939, %v1939
    %v1956 = vcombine.high %v1946, %v1946
    %v1957 = vcombine.high %v1953, %v1953
    %v1958 = vlaneseq
    %v1959 = vshrl.u32 %v1958, 7
    %v1960 = vsub.s32 0, %v1959
    %v1961 = vrot.slane %v1932, %v1960
    %v1962 = vlaneseq
    %v1963 = vshrl.u32 %v1962, 7
    %v1964 = vsub.s32 0, %v1963
    %v1965 = vrot.slane %v1946, %v1964
    %v1966 = vlaneseq
    %v1967 = vshrl.u32 %v1966, 7
    %v1968 = vsub.s32 0, %v1967
    %v1969 = vrot.slane %v1954, %v1968
    %v1970 = vlaneseq
    %v1971 = vshrl.u32 %v1970, 7
    %v1972 = vsub.s32 0, %v1971
    %v1973 = vrot.slane %v1956, %v1972
    %v1974 = vlaneseq
    %v1975 = vshrl.u32 %v1974, 7
    %v1976 = vsub.s32 0, %v1975
    %v1977 = vrot.slane %v1939, %v1976
    %v1978 = vlaneseq
    %v1979 = vshrl.u32 %v1978, 7
    %v1980 = vsub.s32 0, %v1979
    %v1981 = vrot.slane %v1953, %v1980
    %v1982 = vlaneseq
    %v1983 = vshrl.u32 %v1982, 7
    %v1984 = vsub.s32 0, %v1983
    %v1985 = vrot.slane %v1955, %v1984
    %v1986 = vlaneseq
    %v1987 = vshrl.u32 %v1986, 7
    %v1988 = vsub.s32 0, %v1987
    %v1989 = vrot.slane %v1957, %v1988
    %2006 = vrot.lane.b32.xlu0 %v1777, 25
    %v2007 = vpop.permute.xlu0 %2006
    %2008 = vrot.lane.b32.xlu0 %v1778, 25
    %v2009 = vpop.permute.xlu0 %2008
    %2010 = vrot.lane.b32.xlu0 %v1779, 25
    %v2011 = vpop.permute.xlu0 %2010
    %2012 = vrot.lane.b32.xlu0 %v1780, 25
    %v2013 = vpop.permute.xlu0 %2012
    %2014 = vrot.lane.b32.xlu0 %v1781, 25
    %v2015 = vpop.permute.xlu0 %2014
    %2016 = vrot.lane.b32.xlu0 %v1782, 25
    %v2017 = vpop.permute.xlu0 %2016
    %2018 = vrot.lane.b32.xlu0 %v1783, 25
    %v2019 = vpop.permute.xlu0 %2018
    %2020 = vrot.lane.b32.xlu0 %v1784, 25
    %v2021 = vpop.permute.xlu0 %2020
    %v2030 = vmul.f32 %v1961, %v2007
    %v2031 = vmul.f32 %v1965, %v2009
    %v2032 = vmul.f32 %v1969, %v2011
    %v2033 = vmul.f32 %v1973, %v2013
    %v2034 = vmul.f32 %v1977, %v2015
    %v2035 = vmul.f32 %v1981, %v2017
    %v2036 = vmul.f32 %v1985, %v2019
    %v2037 = vmul.f32 %v1989, %v2021
    %2046 = vrot.lane.b32.xlu0 %v2030, 103
    %v2047 = vpop.permute.xlu0 %2046
    %2048 = vrot.lane.b32.xlu0 %v2031, 103
    %v2049 = vpop.permute.xlu0 %2048
    %2050 = vrot.lane.b32.xlu0 %v2032, 103
    %v2051 = vpop.permute.xlu0 %2050
    %2052 = vrot.lane.b32.xlu0 %v2033, 103
    %v2053 = vpop.permute.xlu0 %2052
    %2054 = vrot.lane.b32.xlu0 %v2034, 103
    %v2055 = vpop.permute.xlu0 %2054
    %2056 = vrot.lane.b32.xlu0 %v2035, 103
    %v2057 = vpop.permute.xlu0 %2056
    %2058 = vrot.lane.b32.xlu0 %v2036, 103
    %v2059 = vpop.permute.xlu0 %2058
    %2060 = vrot.lane.b32.xlu0 %v2037, 103
    %v2061 = vpop.permute.xlu0 %2060
    %v2070 = vsel %vm1883, %v2047, 0.0
    %2071 = vadd.xlane.f32.xlu0 %v2070
    %v2072 = vpop.xlane.xlu0 %2071
    %v2073 = vsel %vm1883, %v2049, 0.0
    %2074 = vadd.xlane.f32.xlu0 %v2073
    %v2075 = vpop.xlane.xlu0 %2074
    %v2076 = vsel %vm1883, %v2051, 0.0
    %2077 = vadd.xlane.f32.xlu0 %v2076
    %v2078 = vpop.xlane.xlu0 %2077
    %v2079 = vsel %vm1883, %v2053, 0.0
    %2080 = vadd.xlane.f32.xlu0 %v2079
    %v2081 = vpop.xlane.xlu0 %2080
    %v2082 = vsel %vm1883, %v2055, 0.0
    %2083 = vadd.xlane.f32.xlu0 %v2082
    %v2084 = vpop.xlane.xlu0 %2083
    %v2085 = vsel %vm1883, %v2057, 0.0
    %2086 = vadd.xlane.f32.xlu0 %v2085
    %v2087 = vpop.xlane.xlu0 %2086
    %v2088 = vsel %vm1883, %v2059, 0.0
    %2089 = vadd.xlane.f32.xlu0 %v2088
    %v2090 = vpop.xlane.xlu0 %2089
    %v2091 = vsel %vm1883, %v2061, 0.0
    %2092 = vadd.xlane.f32.xlu0 %v2091
    %v2093 = vpop.xlane.xlu0 %2092
    %v2094 = vld [vmem:[%s6] sm:$0xff]
    %v2095 = vld [vmem:[%s7] sm:$0xff]
    %v2096 = vld [vmem:[%s7 + $0x8] sm:$0x1]
    %2098 = vrot.lane.b32.xlu0 %v1776, 78
    %v2099 = vpop.permute.xlu0 %2098
    %v2100 = vsel %vm1771, %v2099, 0
    %vm2102 = vcmask 1040384
    %v2104 = vsel %vm2102, %v2096, 0
    %2106 = vmatprep.subr.mxu0 0.0
    %2107 = vmatpush1.msra.mxu0 0.0
    %2108 = vmatprep.subr.mxu0 0.0
    %2109 = vmatpush1.msra.mxu0 0.0
    %2110 = vmatprep.subr.mxu0 0.0
    %2111 = vmatpush1.msra.mxu0 0.0
    %2112 = vmatprep.subr.mxu0 0.0
    %2113 = vmatpush1.msra.mxu0 0.0
    %2114 = vmatprep.subr.mxu0 0.0
    %2115 = vmatpush1.msra.mxu0 0.0
    %2116 = vmatprep.subr.mxu0 0.0
    %2117 = vmatpush1.msra.mxu0 0.0
    %2118 = vmatprep.subr.mxu0 0.0
    %2119 = vmatpush1.msra.mxu0 0.0
    %2120 = vmatprep.subr.mxu0 0.0
    %2121 = vmatpush1.msra.mxu0 0.0
    %2122 = vmatprep.subr.mxu0 0.0
    %2123 = vmatpush1.msra.mxu0 0.0
    %2124 = vmatprep.subr.mxu0 0.0
    %2125 = vmatpush1.msra.mxu0 0.0
    %2126 = vmatprep.subr.mxu0 0.0
    %2127 = vmatpush1.msra.mxu0 0.0
    %2128 = vmatprep.subr.mxu0 0.0
    %2129 = vmatpush1.msra.mxu0 0.0
    %2130 = vmatprep.subr.mxu0 0.0
    %2131 = vmatpush1.msra.mxu0 0.0
    %2132 = vmatprep.subr.mxu0 0.0
    %2133 = vmatpush1.msra.mxu0 0.0
    %2134 = vmatprep.subr.mxu0 0.0
    %2135 = vmatpush1.msra.mxu0 %v2104
    %2136 = vmatprep.subr.mxu0 0.0
    %2137 = vmatpush1.msra.mxu0 %v2095
    %2138 = vmatprep.subr.mxu0 0.0
    %2139 = vmatpush2.msra.mxu0 0.0
    %2140 = vmatprep.subr.mxu0 0.0
    %2141 = vmatpush2.msra.mxu0 0.0
    %2142 = vmatprep.subr.mxu0 0.0
    %2143 = vmatpush2.msra.mxu0 0.0
    %2144 = vmatprep.subr.mxu0 0.0
    %2145 = vmatpush2.msra.mxu0 0.0
    %2146 = vmatprep.subr.mxu0 0.0
    %2147 = vmatpush2.msra.mxu0 0.0
    %2148 = vmatprep.subr.mxu0 0.0
    %2149 = vmatpush2.msra.mxu0 0.0
    %2150 = vmatprep.subr.mxu0 0.0
    %2151 = vmatpush2.msra.mxu0 0.0
    %2152 = vmatprep.subr.mxu0 0.0
    %2153 = vmatpush2.msra.mxu0 0.0
    %2154 = vmatprep.subr.mxu0 0.0
    %2155 = vmatpush2.msra.mxu0 0.0
    %2156 = vmatprep.subr.mxu0 0.0
    %2157 = vmatpush2.msra.mxu0 0.0
    %2158 = vmatprep.subr.mxu0 0.0
    %2159 = vmatpush2.msra.mxu0 0.0
    %2160 = vmatprep.subr.mxu0 0.0
    %2161 = vmatpush2.msra.mxu0 0.0
    %2162 = vmatprep.subr.mxu0 0.0
    %2163 = vmatpush2.msra.mxu0 0.0
    %2164 = vmatprep.subr.mxu0 0.0
    %2165 = vmatpush2.msra.mxu0 0.0
    %2166 = vmatprep.subr.mxu0 0.0
    %2167 = vmatpush2.msra.mxu0 0.0
    %2168 = vmatprep.subr.mxu0 0.0
    %2169 = vmatpush2.msra.mxu0 0.0
    %2170 = vmatprep.mubr.f32.mxu0 0.0
    %2171 = vmatmul.mubr.f32.gmra.mxu0 %v2100
    %v2172 = vpop.f32.mrf.mxu0
    %v2173 = vadd.f32 0.0, %v2172
    %v2174 = vpop.f32.mrf.mxu0
    %2175 = vdwg.mxu0
    %2177 = vset.pattern.permute.xlu0 0
    %2178 = vperm.xlu0 %2177, %v2094
    %v2179 = vpop.permute.xlu0 %2178
    %v2181 = vmul.f32 %v2179, %v2173
    %v2190 = vlaneseq
    %v2191 = vshrl.u32 %v2190, 7
    %v2192 = vsub.s32 %v66, %v2191
    %v2193 = vrot.slane %v1886, %v2192
    %v2194 = vlaneseq
    %v2195 = vshrl.u32 %v2194, 7
    %v2196 = vsub.s32 %v66, %v2195
    %v2197 = vrot.slane %v1889, %v2196
    %v2198 = vlaneseq
    %v2199 = vshrl.u32 %v2198, 7
    %v2200 = vsub.s32 %v66, %v2199
    %v2201 = vrot.slane %v1892, %v2200
    %v2202 = vlaneseq
    %v2203 = vshrl.u32 %v2202, 7
    %v2204 = vsub.s32 %v66, %v2203
    %v2205 = vrot.slane %v1895, %v2204
    %v2206 = vlaneseq
    %v2207 = vshrl.u32 %v2206, 7
    %v2208 = vsub.s32 %v66, %v2207
    %v2209 = vrot.slane %v1898, %v2208
    %v2210 = vlaneseq
    %v2211 = vshrl.u32 %v2210, 7
    %v2212 = vsub.s32 %v66, %v2211
    %v2213 = vrot.slane %v1901, %v2212
    %v2214 = vlaneseq
    %v2215 = vshrl.u32 %v2214, 7
    %v2216 = vsub.s32 %v66, %v2215
    %v2217 = vrot.slane %v1904, %v2216
    %v2218 = vlaneseq
    %v2219 = vshrl.u32 %v2218, 7
    %v2220 = vsub.s32 %v66, %v2219
    %v2221 = vrot.slane %v1907, %v2220
    %vm2222 = vcmask 1041409
    %v2223 = vsel %vm2222, %v2197, %v2193
    %vm2224 = vcmask 1042434
    %v2225 = vsel %vm2224, %v2201, %v2223
    %vm2226 = vcmask 1043459
    %v2227 = vsel %vm2226, %v2205, %v2225
    %vm2228 = vcmask 1044484
    %v2229 = vsel %vm2228, %v2209, %v2227
    %vm2230 = vcmask 1045509
    %v2231 = vsel %vm2230, %v2213, %v2229
    %vm2232 = vcmask 1046534
    %v2233 = vsel %vm2232, %v2217, %v2231
    %vm2234 = vcmask 1047559
    %v2235 = vsel %vm2234, %v2221, %v2233
    %vm2237 = vcmask 15360
    %2238 = vst.msk [vmem:[%s8] sm:$0xff] %vm2237, %v2235
    %v2240 = vlaneseq
    %v2241 = vshrl.u32 %v2240, 7
    %v2242 = vsub.s32 0, %v2241
    %v2243 = vrot.slane %v2181, %v2242
    %2245 = vbcast.lane.b32.xlu0 %v2243, 256
    %v2246 = vpop.permute.xlu0 %2245
    %v2247 = vlaneseq
    %v2248 = vshrl.u32 %v2247, 7
    %v2249 = vsub.s32 1, %v2248
    %v2250 = vrot.slane %v2181, %v2249
    %2252 = vbcast.lane.b32.xlu0 %v2250, 256
    %v2253 = vpop.permute.xlu0 %2252
    %v2254 = vlaneseq
    %v2255 = vshrl.u32 %v2254, 7
    %v2256 = vsub.s32 2, %v2255
    %v2257 = vrot.slane %v2181, %v2256
    %2259 = vbcast.lane.b32.xlu0 %v2257, 256
    %v2260 = vpop.permute.xlu0 %2259
    %v2261 = vlaneseq
    %v2262 = vshrl.u32 %v2261, 7
    %v2263 = vsub.s32 3, %v2262
    %v2264 = vrot.slane %v2181, %v2263
    %2266 = vbcast.lane.b32.xlu0 %v2264, 256
    %v2267 = vpop.permute.xlu0 %2266
    %v2268 = vlaneseq
    %v2269 = vshrl.u32 %v2268, 7
    %v2270 = vsub.s32 4, %v2269
    %v2271 = vrot.slane %v2181, %v2270
    %2273 = vbcast.lane.b32.xlu0 %v2271, 256
    %v2274 = vpop.permute.xlu0 %2273
    %v2275 = vlaneseq
    %v2276 = vshrl.u32 %v2275, 7
    %v2277 = vsub.s32 5, %v2276
    %v2278 = vrot.slane %v2181, %v2277
    %2280 = vbcast.lane.b32.xlu0 %v2278, 256
    %v2281 = vpop.permute.xlu0 %2280
    %v2282 = vlaneseq
    %v2283 = vshrl.u32 %v2282, 7
    %v2284 = vsub.s32 6, %v2283
    %v2285 = vrot.slane %v2181, %v2284
    %2287 = vbcast.lane.b32.xlu0 %v2285, 256
    %v2288 = vpop.permute.xlu0 %2287
    %v2289 = vlaneseq
    %v2290 = vshrl.u32 %v2289, 7
    %v2291 = vsub.s32 7, %v2290
    %v2292 = vrot.slane %v2181, %v2291
    %2294 = vbcast.lane.b32.xlu0 %v2292, 256
    %v2295 = vpop.permute.xlu0 %2294
    %v2304 = vadd.f32 %v2072, %v2246
    %v2305 = vadd.f32 %v2075, %v2253
    %v2306 = vadd.f32 %v2078, %v2260
    %v2307 = vadd.f32 %v2081, %v2267
    %v2308 = vadd.f32 %v2084, %v2274
    %v2309 = vadd.f32 %v2087, %v2281
    %v2310 = vadd.f32 %v2090, %v2288
    %v2311 = vadd.f32 %v2093, %v2295
    %2320 = vset.pattern.permute.xlu0 0
    %2321 = vperm.xlu0 %2320, %v2304
    %v2322 = vpop.permute.xlu0 %2321
    %2323 = vset.pattern.permute.xlu0 0
    %2324 = vperm.xlu0 %2323, %v2305
    %v2325 = vpop.permute.xlu0 %2324
    %2326 = vset.pattern.permute.xlu0 0
    %2327 = vperm.xlu0 %2326, %v2306
    %v2328 = vpop.permute.xlu0 %2327
    %2329 = vset.pattern.permute.xlu0 0
    %2330 = vperm.xlu0 %2329, %v2307
    %v2331 = vpop.permute.xlu0 %2330
    %2332 = vset.pattern.permute.xlu0 0
    %2333 = vperm.xlu0 %2332, %v2308
    %v2334 = vpop.permute.xlu0 %2333
    %2335 = vset.pattern.permute.xlu0 0
    %2336 = vperm.xlu0 %2335, %v2309
    %v2337 = vpop.permute.xlu0 %2336
    %2338 = vset.pattern.permute.xlu0 0
    %2339 = vperm.xlu0 %2338, %v2310
    %v2340 = vpop.permute.xlu0 %2339
    %2341 = vset.pattern.permute.xlu0 0
    %2342 = vperm.xlu0 %2341, %v2311
    %v2343 = vpop.permute.xlu0 %2342
    %v2344 = vadd.s32 %v66, 4294967294
    %v2345 = vlaneseq
    %v2346 = vshrl.u32 %v2345, 7
    %v2347 = vsub.s32 %v2344, %v2346
    %v2348 = vrot.slane %v2322, %v2347
    %v2349 = vlaneseq
    %v2350 = vshrl.u32 %v2349, 7
    %v2351 = vsub.s32 %v2344, %v2350
    %v2352 = vrot.slane %v2325, %v2351
    %v2353 = vlaneseq
    %v2354 = vshrl.u32 %v2353, 7
    %v2355 = vsub.s32 %v2344, %v2354
    %v2356 = vrot.slane %v2328, %v2355
    %v2357 = vlaneseq
    %v2358 = vshrl.u32 %v2357, 7
    %v2359 = vsub.s32 %v2344, %v2358
    %v2360 = vrot.slane %v2331, %v2359
    %v2361 = vlaneseq
    %v2362 = vshrl.u32 %v2361, 7
    %v2363 = vsub.s32 %v2344, %v2362
    %v2364 = vrot.slane %v2334, %v2363
    %v2365 = vlaneseq
    %v2366 = vshrl.u32 %v2365, 7
    %v2367 = vsub.s32 %v2344, %v2366
    %v2368 = vrot.slane %v2337, %v2367
    %v2369 = vlaneseq
    %v2370 = vshrl.u32 %v2369, 7
    %v2371 = vsub.s32 %v2344, %v2370
    %v2372 = vrot.slane %v2340, %v2371
    %v2373 = vlaneseq
    %v2374 = vshrl.u32 %v2373, 7
    %v2375 = vsub.s32 %v2344, %v2374
    %v2376 = vrot.slane %v2343, %v2375
    %v2377 = vsel %vm2222, %v2352, %v2348
    %v2378 = vsel %vm2224, %v2356, %v2377
    %v2379 = vsel %vm2226, %v2360, %v2378
    %v2380 = vsel %vm2228, %v2364, %v2379
    %v2381 = vsel %vm2230, %v2368, %v2380
    %v2382 = vsel %vm2232, %v2372, %v2381
    %v2383 = vsel %vm2234, %v2376, %v2382
    %vm2385 = vcmask 31760
    %2386 = vst.msk [vmem:[%s8] sm:$0xff] %vm2385, %v2383
    // Predicated region
    $region42: #{_forward.1} parent=1 // pred_check
      _
    $region43: #{_forward.1} parent=1 // pred_check_branch
      %2388 = sbr.rel (0) target = $region45
    $region44: #{_forward.1} parent=1 // pred_region
      _
    $region45: #{_forward.1} parent=1 // pred_fallthru
      _
    // Predicated region
    $region46: #{_forward.1} parent=1 // pred_check
      _
    $region47: #{_forward.1} parent=1 // pred_check_branch
      %2390 = sbr.rel (0) target = $region49
    $region48: #{_forward.1} parent=1 // pred_region
      _
    $region49: #{_forward.1} parent=1 // pred_fallthru
      _
    %2391 = vsyncpa [#allocation3], 1
    %2392 = vsyncpa [#allocation5], 1

</llo_original>
